<compile_context>
chip_gen: v6e
topology: v6e:2x2x1
jax: 0.10.0
libtpu: 0.0.40
codegen_flags: <defaults>
</compile_context>

<pallas_src>
import functools

import jax
import jax.numpy as jnp
from jax import lax
from jax.experimental import pallas as pl
from jax.experimental.pallas import tpu as pltpu

KSIZE = 7
PAD = (KSIZE - 1) // 2  # 3
BN_EPS = 1e-5


def cbam_kernel(x_ref, w1_ref, b1_ref, w2_ref, b2_ref, wtap_ref, bn_ref,
                o_ref, *, H, W):
    x = x_ref[...]                                # (B, C, HW) f32, lane-dense
    B, C, HW = x.shape
    Cr = w1_ref.shape[0]

    # ---------------- ChannelGate ----------------
    # One read of x feeds both reductions; tiny MLP (Cr == 2) stays on the VPU.
    avg = jnp.mean(x, axis=2)                     # (B, C)
    mx = jnp.max(x, axis=2)                       # (B, C)
    pooled = jnp.concatenate([avg, mx], axis=0)   # (2B, C) fused avg/max branch

    att = b2_ref[...]                             # (1, C), broadcasts up
    for j in range(Cr):                           # Cr == 2, fully unrolled
        w1j = w1_ref[j:j + 1, :]                                         # (1, C)
        hj = jnp.sum(pooled * w1j, axis=-1, keepdims=True) + b1_ref[j]   # (2B, 1)
        hj = jnp.maximum(hj, 0.0)                                        # ReLU
        att = att + hj * w2_ref[j:j + 1, :]                              # (2B, C)

    channel_att_sum = att[0:B, :] + att[B:2 * B, :]   # avg-branch + max-branch
    scale_c = jax.nn.sigmoid(channel_att_sum)         # (B, C)
    x1 = x * scale_c[:, :, None]                      # (B, C, HW)

    # ---------------- SpatialGate ----------------
    # ChannelPool -> stacked (2B, HW): rows [0,B) = channel-max,
    # rows [B,2B) = channel-mean.
    cmax = jnp.max(x1, axis=1)                    # (B, HW)
    cmean = jnp.mean(x1, axis=1)                  # (B, HW)
    planes = jnp.concatenate([cmax, cmean], axis=0)          # (2B, HW)

    # Boundary masks once, on a (1, HW) row, as f32 0/1 multipliers.
    idx = lax.broadcasted_iota(jnp.int32, (1, HW), 1)
    if (W & (W - 1)) == 0:                        # power-of-two fast path
        row = jnp.right_shift(idx, W.bit_length() - 1)
        col = jnp.bitwise_and(idx, W - 1)
    else:
        row = idx // W
        col = idx - row * W
    w_ok = {}
    h_ok = {}
    for d in range(1, PAD + 1):
        w_ok[d] = (col < (W - d)).astype(jnp.float32)
        w_ok[-d] = (col >= d).astype(jnp.float32)
        h_ok[d] = (row < (H - d)).astype(jnp.float32)
        h_ok[-d] = (row >= d).astype(jnp.float32)

    # 7x7 conv (2 -> 1 channels, stride 1, pad 3, no bias), 2D shift
    # decomposed as dw-then-dh rolls: 12 rolls + 12 mask multiplies total
    # (was 96 rolls / ~50 selects), plus 49 broadcast FMAs on (2B, HW).
    #
    # Step 1: pre-roll the stacked plane by each dw and zero out-of-bounds
    # columns.  The column mask depends only on col(p), which is invariant
    # under the later roll-by-(dh*W), so applying it here is exact.
    shifted = {}
    for dw in range(-PAD, PAD + 1):
        if dw == 0:
            shifted[dw] = planes
        else:
            s = pltpu.roll(planes, (-dw) % HW, axis=1)       # s[p] = planes[p+dw]
            shifted[dw] = s * w_ok[dw]

    # Step 2+3: per dh, horizontal weighted sum over dw (per-tap weights come
    # from the pre-arranged (2B, 49) tap table: max-plane weight on the first
    # B sublanes, mean-plane weight on the next B), then ONE roll by dh*W and
    # ONE row mask before accumulating.
    conv_acc = jnp.zeros((2 * B, HW), jnp.float32)
    for dh in range(-PAD, PAD + 1):
        acc = None
        for dw in range(-PAD, PAD + 1):
            k = (dh + PAD) * KSIZE + (dw + PAD)
            term = wtap_ref[:, k:k + 1] * shifted[dw]        # (2B,1)*(2B,HW)
            acc = term if acc is None else acc + term
        if dh != 0:
            acc = pltpu.roll(acc, (-dh * W) % HW, axis=1) * h_ok[dh]
        conv_acc = conv_acc + acc

    conv = conv_acc[0:B, :] + conv_acc[B:2 * B, :]           # collapse planes

    # BatchNorm2d(1): training-mode batch stats over (N, H, W), biased
    # variance, centered two-pass (safer than E[x^2]-E[x]^2).
    gamma = bn_ref[0]
    beta = bn_ref[1]
    n = float(B * HW)
    mean = jnp.sum(conv) / n
    centered = conv - mean
    var = jnp.sum(centered * centered) / n
    bn_out = centered * lax.rsqrt(var + BN_EPS) * gamma + beta

    scale_s = jax.nn.sigmoid(bn_out)              # (B, HW)
    o_ref[...] = x1 * scale_s[:, None, :]         # full-lane unmasked store


def cbam_forward(x, w1, b1, w2t, b2, wconv_flat, bn_params):
    B, C, H, W = x.shape
    HW = H * W
    x_flat = x.reshape(B, C, HW)                  # lane-dense layout plumbing

    # Pre-arrange the 7x7 conv weights as a (2B, 49) tap table: max-plane
    # weights replicated on the first B sublanes, mean-plane on the next B.
    # Host-side prep is free and turns each tap into one broadcast-FMA.
    nk = KSIZE * KSIZE
    wmax = jnp.broadcast_to(wconv_flat[:nk][None, :], (B, nk))
    wmean = jnp.broadcast_to(wconv_flat[nk:][None, :], (B, nk))
    wtap = jnp.concatenate([wmax, wmean], axis=0)            # (2B, 49)

    kernel = functools.partial(cbam_kernel, H=H, W=W)
    out_flat = pl.pallas_call(
        kernel,
        out_shape=jax.ShapeDtypeStruct((B, C, HW), jnp.float32),
        in_specs=[
            pl.BlockSpec(memory_space=pltpu.MemorySpace.VMEM),   # x (B,C,HW)
            pl.BlockSpec(memory_space=pltpu.MemorySpace.VMEM),   # w1 (Cr,C)
            pl.BlockSpec(memory_space=pltpu.MemorySpace.SMEM),   # b1 (Cr,)
            pl.BlockSpec(memory_space=pltpu.MemorySpace.VMEM),   # w2t (Cr,C)
            pl.BlockSpec(memory_space=pltpu.MemorySpace.VMEM),   # b2 (1,C)
            pl.BlockSpec(memory_space=pltpu.MemorySpace.VMEM),   # wtap (2B,49)
            pl.BlockSpec(memory_space=pltpu.MemorySpace.SMEM),   # bn gamma/beta (2,)
        ],
        out_specs=pl.BlockSpec(memory_space=pltpu.MemorySpace.VMEM),
    )(x_flat, w1, b1, w2t, b2, wtap, bn_params)
    return out_flat.reshape(B, C, H, W)


def cbam_reference(x, w1, b1, w2t, b2, wconv_flat, bn_params):
    """Pure-JAX reference matching the torch semantics (for self-check)."""
    B, C, H, W = x.shape
    avg = x.mean(axis=(2, 3))
    mx = x.max(axis=(2, 3))

    def mlp(v):
        return jnp.maximum(v @ w1.T + b1, 0.0) @ w2t + b2

    scale_c = jax.nn.sigmoid(mlp(avg) + mlp(mx))
    x1 = x * scale_c[:, :, None, None]

    cp = jnp.stack([x1.max(axis=1), x1.mean(axis=1)], axis=1)        # (B, 2, H, W)
    wconv = wconv_flat.reshape(1, 2, KSIZE, KSIZE)                   # OIHW
    conv = lax.conv_general_dilated(
        cp, wconv, window_strides=(1, 1), padding=((PAD, PAD), (PAD, PAD)),
        dimension_numbers=("NCHW", "OIHW", "NCHW"))[:, 0]            # (B, H, W)
    mean = conv.mean()
    var = ((conv - mean) ** 2).mean()
    bn_out = (conv - mean) * lax.rsqrt(var + BN_EPS) * bn_params[0] + bn_params[1]
    return x1 * jax.nn.sigmoid(bn_out)[:, None, :, :]


if __name__ == "__main__":
    # cbam(gate_channels=32, reduction_ratio=16, pool_types=['avg','max'])
    B, C, H, W = 2, 32, 16, 16
    Cr = C // 16  # reduction_ratio = 16 -> hidden = 2

    key = jax.random.PRNGKey(0)
    kx, k1, k2, k3, k4, k5 = jax.random.split(key, 6)

    x = jax.random.normal(kx, (B, C, H, W), jnp.float32)

    # ChannelGate MLP parameters.
    # w1  : Linear1 weight in torch layout (out=Cr, in=C).
    # w2t : Linear2 weight transposed, i.e. (Cr, C).
    w1 = jax.random.normal(k1, (Cr, C), jnp.float32) * 0.1
    b1 = jax.random.normal(k2, (Cr,), jnp.float32) * 0.1
    w2t = jax.random.normal(k3, (Cr, C), jnp.float32) * 0.1
    b2 = jax.random.normal(k4, (1, C), jnp.float32) * 0.1

    # SpatialGate 7x7 conv weight (out=1, in=2, 7, 7) flattened; no bias.
    wconv_flat = (jax.random.normal(k5, (2, KSIZE, KSIZE), jnp.float32) * 0.1).reshape(-1)
    # BatchNorm2d(1) affine params at init: gamma=1, beta=0.
    bn_params = jnp.array([1.0, 0.0], jnp.float32)

    out = cbam_forward(x, w1, b1, w2t, b2, wconv_flat, bn_params)
    out = jax.block_until_ready(out)

    ref = cbam_reference(x, w1, b1, w2t, b2, wconv_flat, bn_params)
    assert out.shape == (B, C, H, W)
    assert jnp.allclose(out, ref, rtol=1e-3, atol=1e-3), "mismatch vs JAX reference"

    print("KERNEL_OK")
</pallas_src>

<mosaic_0001>
module attributes {stable_mosaic.version = 11 : i64} {
  func.func @cbam_kernel(%arg0: memref<2x32x256xf32, #tpu.memory_space<vmem>>, %arg1: memref<2x32xf32, #tpu.memory_space<vmem>>, %arg2: memref<2xf32, #tpu.memory_space<smem>>, %arg3: memref<2x32xf32, #tpu.memory_space<vmem>>, %arg4: memref<1x32xf32, #tpu.memory_space<vmem>>, %arg5: memref<4x49xf32, #tpu.memory_space<vmem>>, %arg6: memref<2xf32, #tpu.memory_space<smem>>, %arg7: memref<2x32x256xf32, #tpu.memory_space<vmem>>) attributes {dimension_semantics = [], scalar_prefetch = 0 : i64, scratch_operands = 0 : i64, tpu.core_type = #tpu.core_type<tc>} {
    %c0 = arith.constant 0 : index
    %c0_0 = arith.constant 0 : index
    %c0_1 = arith.constant 0 : index
    %0 = vector.load %arg0[%c0, %c0_0, %c0_1] : memref<2x32x256xf32, #tpu.memory_space<vmem>>, vector<2x32x256xf32>
    %cst = arith.constant dense<0.000000e+00> : vector<2x32xf32>
    %1 = vector.multi_reduction <add>, %0, %cst [2] : vector<2x32x256xf32> to vector<2x32xf32>
    %cst_2 = arith.constant 2.560000e+02 : f32
    %2 = vector.broadcast %cst_2 : f32 to vector<2x32xf32>
    %3 = arith.divf %1, %2 : vector<2x32xf32>
    %cst_3 = arith.constant dense<0xFF800000> : vector<2x32xf32>
    %4 = vector.multi_reduction <maximumf>, %0, %cst_3 [2] : vector<2x32x256xf32> to vector<2x32xf32>
    %5 = tpu.concatenate %3, %4 in 0 : vector<2x32xf32>, vector<2x32xf32> -> vector<4x32xf32>
    %c0_4 = arith.constant 0 : index
    %c0_5 = arith.constant 0 : index
    %6 = vector.load %arg4[%c0_4, %c0_5] : memref<1x32xf32, #tpu.memory_space<vmem>>, vector<1x32xf32>
    %c0_6 = arith.constant 0 : index
    %c0_7 = arith.constant 0 : index
    %7 = vector.load %arg1[%c0_6, %c0_7] : memref<2x32xf32, #tpu.memory_space<vmem>>, vector<1x32xf32>
    %8 = vector.broadcast %7 : vector<1x32xf32> to vector<4x32xf32>
    %9 = arith.mulf %5, %8 : vector<4x32xf32>
    %cst_8 = arith.constant dense<0.000000e+00> : vector<4xf32>
    %10 = vector.multi_reduction <add>, %9, %cst_8 [1] : vector<4x32xf32> to vector<4xf32>
    %11 = vector.shape_cast %10 : vector<4xf32> to vector<4x1xf32>
    %c0_9 = arith.constant 0 : index
    %12 = memref.load %arg2[%c0_9] : memref<2xf32, #tpu.memory_space<smem>>
    %13 = vector.broadcast %12 : f32 to vector<4x1xf32>
    %14 = arith.addf %11, %13 : vector<4x1xf32>
    %cst_10 = arith.constant 0.000000e+00 : f32
    %15 = vector.broadcast %cst_10 : f32 to vector<4x1xf32>
    %16 = arith.maximumf %14, %15 : vector<4x1xf32>
    %c0_11 = arith.constant 0 : index
    %c0_12 = arith.constant 0 : index
    %17 = vector.load %arg3[%c0_11, %c0_12] : memref<2x32xf32, #tpu.memory_space<vmem>>, vector<1x32xf32>
    %18 = vector.broadcast %16 : vector<4x1xf32> to vector<4x32xf32>
    %19 = vector.broadcast %17 : vector<1x32xf32> to vector<4x32xf32>
    %20 = arith.mulf %18, %19 : vector<4x32xf32>
    %21 = vector.broadcast %6 : vector<1x32xf32> to vector<4x32xf32>
    %22 = arith.addf %21, %20 : vector<4x32xf32>
    %c1 = arith.constant 1 : index
    %c0_13 = arith.constant 0 : index
    %23 = vector.load %arg1[%c1, %c0_13] : memref<2x32xf32, #tpu.memory_space<vmem>>, vector<1x32xf32>
    %24 = vector.broadcast %23 : vector<1x32xf32> to vector<4x32xf32>
    %25 = arith.mulf %5, %24 : vector<4x32xf32>
    %cst_14 = arith.constant dense<0.000000e+00> : vector<4xf32>
    %26 = vector.multi_reduction <add>, %25, %cst_14 [1] : vector<4x32xf32> to vector<4xf32>
    %27 = vector.shape_cast %26 : vector<4xf32> to vector<4x1xf32>
    %c1_15 = arith.constant 1 : index
    %28 = memref.load %arg2[%c1_15] : memref<2xf32, #tpu.memory_space<smem>>
    %29 = vector.broadcast %28 : f32 to vector<4x1xf32>
    %30 = arith.addf %27, %29 : vector<4x1xf32>
    %cst_16 = arith.constant 0.000000e+00 : f32
    %31 = vector.broadcast %cst_16 : f32 to vector<4x1xf32>
    %32 = arith.maximumf %30, %31 : vector<4x1xf32>
    %c1_17 = arith.constant 1 : index
    %c0_18 = arith.constant 0 : index
    %33 = vector.load %arg3[%c1_17, %c0_18] : memref<2x32xf32, #tpu.memory_space<vmem>>, vector<1x32xf32>
    %34 = vector.broadcast %32 : vector<4x1xf32> to vector<4x32xf32>
    %35 = vector.broadcast %33 : vector<1x32xf32> to vector<4x32xf32>
    %36 = arith.mulf %34, %35 : vector<4x32xf32>
    %37 = arith.addf %22, %36 : vector<4x32xf32>
    %38 = vector.extract_strided_slice %37 {offsets = [0, 0], sizes = [2, 32], strides = [1, 1]} : vector<4x32xf32> to vector<2x32xf32>
    %39 = vector.extract_strided_slice %37 {offsets = [2, 0], sizes = [2, 32], strides = [1, 1]} : vector<4x32xf32> to vector<2x32xf32>
    %40 = arith.addf %38, %39 : vector<2x32xf32>
    %41 = arith.negf %40 : vector<2x32xf32>
    %42 = math.exp %41 : vector<2x32xf32>
    %cst_19 = arith.constant 1.000000e+00 : f32
    %43 = vector.broadcast %cst_19 : f32 to vector<2x32xf32>
    %44 = arith.addf %43, %42 : vector<2x32xf32>
    %45 = arith.divf %43, %44 : vector<2x32xf32>
    %46 = vector.shape_cast %45 : vector<2x32xf32> to vector<2x32x1xf32>
    %47 = vector.broadcast %46 : vector<2x32x1xf32> to vector<2x32x256xf32>
    %48 = arith.mulf %0, %47 : vector<2x32x256xf32>
    %cst_20 = arith.constant dense<0xFF800000> : vector<2x256xf32>
    %49 = vector.multi_reduction <maximumf>, %48, %cst_20 [1] : vector<2x32x256xf32> to vector<2x256xf32>
    %cst_21 = arith.constant dense<0.000000e+00> : vector<2x256xf32>
    %50 = vector.multi_reduction <add>, %48, %cst_21 [1] : vector<2x32x256xf32> to vector<2x256xf32>
    %cst_22 = arith.constant 3.200000e+01 : f32
    %51 = vector.broadcast %cst_22 : f32 to vector<2x256xf32>
    %52 = arith.divf %50, %51 : vector<2x256xf32>
    %53 = tpu.concatenate %49, %52 in 0 : vector<2x256xf32>, vector<2x256xf32> -> vector<4x256xf32>
    %54 = tpu.iota {dimensions = array<i32: 1>} : vector<1x256xi32>
    %c4_i32 = arith.constant 4 : i32
    %55 = vector.broadcast %c4_i32 : i32 to vector<1x256xi32>
    %56 = arith.shrsi %54, %55 : vector<1x256xi32>
    %c15_i32 = arith.constant 15 : i32
    %57 = vector.broadcast %c15_i32 : i32 to vector<1x256xi32>
    %58 = arith.andi %54, %57 : vector<1x256xi32>
    %c15_i32_23 = arith.constant 15 : i32
    %59 = vector.broadcast %c15_i32_23 : i32 to vector<1x256xi32>
    %60 = arith.cmpi slt, %58, %59 : vector<1x256xi32>
    %61 = arith.extui %60 : vector<1x256xi1> to vector<1x256xi32>
    %62 = arith.sitofp %61 : vector<1x256xi32> to vector<1x256xf32>
    %c1_i32 = arith.constant 1 : i32
    %63 = vector.broadcast %c1_i32 : i32 to vector<1x256xi32>
    %64 = arith.cmpi sge, %58, %63 : vector<1x256xi32>
    %65 = arith.extui %64 : vector<1x256xi1> to vector<1x256xi32>
    %66 = arith.sitofp %65 : vector<1x256xi32> to vector<1x256xf32>
    %c15_i32_24 = arith.constant 15 : i32
    %67 = vector.broadcast %c15_i32_24 : i32 to vector<1x256xi32>
    %68 = arith.cmpi slt, %56, %67 : vector<1x256xi32>
    %69 = arith.extui %68 : vector<1x256xi1> to vector<1x256xi32>
    %70 = arith.sitofp %69 : vector<1x256xi32> to vector<1x256xf32>
    %c1_i32_25 = arith.constant 1 : i32
    %71 = vector.broadcast %c1_i32_25 : i32 to vector<1x256xi32>
    %72 = arith.cmpi sge, %56, %71 : vector<1x256xi32>
    %73 = arith.extui %72 : vector<1x256xi1> to vector<1x256xi32>
    %74 = arith.sitofp %73 : vector<1x256xi32> to vector<1x256xf32>
    %c14_i32 = arith.constant 14 : i32
    %75 = vector.broadcast %c14_i32 : i32 to vector<1x256xi32>
    %76 = arith.cmpi slt, %58, %75 : vector<1x256xi32>
    %77 = arith.extui %76 : vector<1x256xi1> to vector<1x256xi32>
    %78 = arith.sitofp %77 : vector<1x256xi32> to vector<1x256xf32>
    %c2_i32 = arith.constant 2 : i32
    %79 = vector.broadcast %c2_i32 : i32 to vector<1x256xi32>
    %80 = arith.cmpi sge, %58, %79 : vector<1x256xi32>
    %81 = arith.extui %80 : vector<1x256xi1> to vector<1x256xi32>
    %82 = arith.sitofp %81 : vector<1x256xi32> to vector<1x256xf32>
    %c14_i32_26 = arith.constant 14 : i32
    %83 = vector.broadcast %c14_i32_26 : i32 to vector<1x256xi32>
    %84 = arith.cmpi slt, %56, %83 : vector<1x256xi32>
    %85 = arith.extui %84 : vector<1x256xi1> to vector<1x256xi32>
    %86 = arith.sitofp %85 : vector<1x256xi32> to vector<1x256xf32>
    %c2_i32_27 = arith.constant 2 : i32
    %87 = vector.broadcast %c2_i32_27 : i32 to vector<1x256xi32>
    %88 = arith.cmpi sge, %56, %87 : vector<1x256xi32>
    %89 = arith.extui %88 : vector<1x256xi1> to vector<1x256xi32>
    %90 = arith.sitofp %89 : vector<1x256xi32> to vector<1x256xf32>
    %c13_i32 = arith.constant 13 : i32
    %91 = vector.broadcast %c13_i32 : i32 to vector<1x256xi32>
    %92 = arith.cmpi slt, %58, %91 : vector<1x256xi32>
    %93 = arith.extui %92 : vector<1x256xi1> to vector<1x256xi32>
    %94 = arith.sitofp %93 : vector<1x256xi32> to vector<1x256xf32>
    %c3_i32 = arith.constant 3 : i32
    %95 = vector.broadcast %c3_i32 : i32 to vector<1x256xi32>
    %96 = arith.cmpi sge, %58, %95 : vector<1x256xi32>
    %97 = arith.extui %96 : vector<1x256xi1> to vector<1x256xi32>
    %98 = arith.sitofp %97 : vector<1x256xi32> to vector<1x256xf32>
    %c13_i32_28 = arith.constant 13 : i32
    %99 = vector.broadcast %c13_i32_28 : i32 to vector<1x256xi32>
    %100 = arith.cmpi slt, %56, %99 : vector<1x256xi32>
    %101 = arith.extui %100 : vector<1x256xi1> to vector<1x256xi32>
    %102 = arith.sitofp %101 : vector<1x256xi32> to vector<1x256xf32>
    %c3_i32_29 = arith.constant 3 : i32
    %103 = vector.broadcast %c3_i32_29 : i32 to vector<1x256xi32>
    %104 = arith.cmpi sge, %56, %103 : vector<1x256xi32>
    %105 = arith.extui %104 : vector<1x256xi1> to vector<1x256xi32>
    %106 = arith.sitofp %105 : vector<1x256xi32> to vector<1x256xf32>
    %c3_i32_30 = arith.constant 3 : i32
    %107 = tpu.dynamic_rotate %53 by %c3_i32_30 dim 1 : vector<4x256xf32>, i32 -> vector<4x256xf32>
    %108 = vector.broadcast %98 : vector<1x256xf32> to vector<4x256xf32>
    %109 = arith.mulf %107, %108 : vector<4x256xf32>
    %c2_i32_31 = arith.constant 2 : i32
    %110 = tpu.dynamic_rotate %53 by %c2_i32_31 dim 1 : vector<4x256xf32>, i32 -> vector<4x256xf32>
    %111 = vector.broadcast %82 : vector<1x256xf32> to vector<4x256xf32>
    %112 = arith.mulf %110, %111 : vector<4x256xf32>
    %c1_i32_32 = arith.constant 1 : i32
    %113 = tpu.dynamic_rotate %53 by %c1_i32_32 dim 1 : vector<4x256xf32>, i32 -> vector<4x256xf32>
    %114 = vector.broadcast %66 : vector<1x256xf32> to vector<4x256xf32>
    %115 = arith.mulf %113, %114 : vector<4x256xf32>
    %c255_i32 = arith.constant 255 : i32
    %116 = tpu.dynamic_rotate %53 by %c255_i32 dim 1 : vector<4x256xf32>, i32 -> vector<4x256xf32>
    %117 = vector.broadcast %62 : vector<1x256xf32> to vector<4x256xf32>
    %118 = arith.mulf %116, %117 : vector<4x256xf32>
    %c254_i32 = arith.constant 254 : i32
    %119 = tpu.dynamic_rotate %53 by %c254_i32 dim 1 : vector<4x256xf32>, i32 -> vector<4x256xf32>
    %120 = vector.broadcast %78 : vector<1x256xf32> to vector<4x256xf32>
    %121 = arith.mulf %119, %120 : vector<4x256xf32>
    %c253_i32 = arith.constant 253 : i32
    %122 = tpu.dynamic_rotate %53 by %c253_i32 dim 1 : vector<4x256xf32>, i32 -> vector<4x256xf32>
    %123 = vector.broadcast %94 : vector<1x256xf32> to vector<4x256xf32>
    %124 = arith.mulf %122, %123 : vector<4x256xf32>
    %cst_33 = arith.constant 0.000000e+00 : f32
    %125 = vector.broadcast %cst_33 : f32 to vector<4x256xf32>
    %c0_34 = arith.constant 0 : index
    %c0_35 = arith.constant 0 : index
    %126 = vector.load %arg5[%c0_34, %c0_35] : memref<4x49xf32, #tpu.memory_space<vmem>>, vector<4x1xf32>
    %127 = vector.broadcast %126 : vector<4x1xf32> to vector<4x256xf32>
    %128 = arith.mulf %127, %109 : vector<4x256xf32>
    %c0_36 = arith.constant 0 : index
    %c1_37 = arith.constant 1 : index
    %129 = vector.load %arg5[%c0_36, %c1_37] : memref<4x49xf32, #tpu.memory_space<vmem>>, vector<4x1xf32>
    %130 = vector.broadcast %129 : vector<4x1xf32> to vector<4x256xf32>
    %131 = arith.mulf %130, %112 : vector<4x256xf32>
    %132 = arith.addf %128, %131 : vector<4x256xf32>
    %c0_38 = arith.constant 0 : index
    %c2 = arith.constant 2 : index
    %133 = vector.load %arg5[%c0_38, %c2] : memref<4x49xf32, #tpu.memory_space<vmem>>, vector<4x1xf32>
    %134 = vector.broadcast %133 : vector<4x1xf32> to vector<4x256xf32>
    %135 = arith.mulf %134, %115 : vector<4x256xf32>
    %136 = arith.addf %132, %135 : vector<4x256xf32>
    %c0_39 = arith.constant 0 : index
    %c3 = arith.constant 3 : index
    %137 = vector.load %arg5[%c0_39, %c3] : memref<4x49xf32, #tpu.memory_space<vmem>>, vector<4x1xf32>
    %138 = vector.broadcast %137 : vector<4x1xf32> to vector<4x256xf32>
    %139 = arith.mulf %138, %53 : vector<4x256xf32>
    %140 = arith.addf %136, %139 : vector<4x256xf32>
    %c0_40 = arith.constant 0 : index
    %c4 = arith.constant 4 : index
    %141 = vector.load %arg5[%c0_40, %c4] : memref<4x49xf32, #tpu.memory_space<vmem>>, vector<4x1xf32>
    %142 = vector.broadcast %141 : vector<4x1xf32> to vector<4x256xf32>
    %143 = arith.mulf %142, %118 : vector<4x256xf32>
    %144 = arith.addf %140, %143 : vector<4x256xf32>
    %c0_41 = arith.constant 0 : index
    %c5 = arith.constant 5 : index
    %145 = vector.load %arg5[%c0_41, %c5] : memref<4x49xf32, #tpu.memory_space<vmem>>, vector<4x1xf32>
    %146 = vector.broadcast %145 : vector<4x1xf32> to vector<4x256xf32>
    %147 = arith.mulf %146, %121 : vector<4x256xf32>
    %148 = arith.addf %144, %147 : vector<4x256xf32>
    %c0_42 = arith.constant 0 : index
    %c6 = arith.constant 6 : index
    %149 = vector.load %arg5[%c0_42, %c6] : memref<4x49xf32, #tpu.memory_space<vmem>>, vector<4x1xf32>
    %150 = vector.broadcast %149 : vector<4x1xf32> to vector<4x256xf32>
    %151 = arith.mulf %150, %124 : vector<4x256xf32>
    %152 = arith.addf %148, %151 : vector<4x256xf32>
    %c48_i32 = arith.constant 48 : i32
    %153 = tpu.dynamic_rotate %152 by %c48_i32 dim 1 : vector<4x256xf32>, i32 -> vector<4x256xf32>
    %154 = vector.broadcast %106 : vector<1x256xf32> to vector<4x256xf32>
    %155 = arith.mulf %153, %154 : vector<4x256xf32>
    %156 = arith.addf %125, %155 : vector<4x256xf32>
    %c0_43 = arith.constant 0 : index
    %c7 = arith.constant 7 : index
    %157 = vector.load %arg5[%c0_43, %c7] : memref<4x49xf32, #tpu.memory_space<vmem>>, vector<4x1xf32>
    %158 = vector.broadcast %157 : vector<4x1xf32> to vector<4x256xf32>
    %159 = arith.mulf %158, %109 : vector<4x256xf32>
    %c0_44 = arith.constant 0 : index
    %c8 = arith.constant 8 : index
    %160 = vector.load %arg5[%c0_44, %c8] : memref<4x49xf32, #tpu.memory_space<vmem>>, vector<4x1xf32>
    %161 = vector.broadcast %160 : vector<4x1xf32> to vector<4x256xf32>
    %162 = arith.mulf %161, %112 : vector<4x256xf32>
    %163 = arith.addf %159, %162 : vector<4x256xf32>
    %c0_45 = arith.constant 0 : index
    %c9 = arith.constant 9 : index
    %164 = vector.load %arg5[%c0_45, %c9] : memref<4x49xf32, #tpu.memory_space<vmem>>, vector<4x1xf32>
    %165 = vector.broadcast %164 : vector<4x1xf32> to vector<4x256xf32>
    %166 = arith.mulf %165, %115 : vector<4x256xf32>
    %167 = arith.addf %163, %166 : vector<4x256xf32>
    %c0_46 = arith.constant 0 : index
    %c10 = arith.constant 10 : index
    %168 = vector.load %arg5[%c0_46, %c10] : memref<4x49xf32, #tpu.memory_space<vmem>>, vector<4x1xf32>
    %169 = vector.broadcast %168 : vector<4x1xf32> to vector<4x256xf32>
    %170 = arith.mulf %169, %53 : vector<4x256xf32>
    %171 = arith.addf %167, %170 : vector<4x256xf32>
    %c0_47 = arith.constant 0 : index
    %c11 = arith.constant 11 : index
    %172 = vector.load %arg5[%c0_47, %c11] : memref<4x49xf32, #tpu.memory_space<vmem>>, vector<4x1xf32>
    %173 = vector.broadcast %172 : vector<4x1xf32> to vector<4x256xf32>
    %174 = arith.mulf %173, %118 : vector<4x256xf32>
    %175 = arith.addf %171, %174 : vector<4x256xf32>
    %c0_48 = arith.constant 0 : index
    %c12 = arith.constant 12 : index
    %176 = vector.load %arg5[%c0_48, %c12] : memref<4x49xf32, #tpu.memory_space<vmem>>, vector<4x1xf32>
    %177 = vector.broadcast %176 : vector<4x1xf32> to vector<4x256xf32>
    %178 = arith.mulf %177, %121 : vector<4x256xf32>
    %179 = arith.addf %175, %178 : vector<4x256xf32>
    %c0_49 = arith.constant 0 : index
    %c13 = arith.constant 13 : index
    %180 = vector.load %arg5[%c0_49, %c13] : memref<4x49xf32, #tpu.memory_space<vmem>>, vector<4x1xf32>
    %181 = vector.broadcast %180 : vector<4x1xf32> to vector<4x256xf32>
    %182 = arith.mulf %181, %124 : vector<4x256xf32>
    %183 = arith.addf %179, %182 : vector<4x256xf32>
    %c32_i32 = arith.constant 32 : i32
    %184 = tpu.dynamic_rotate %183 by %c32_i32 dim 1 : vector<4x256xf32>, i32 -> vector<4x256xf32>
    %185 = vector.broadcast %90 : vector<1x256xf32> to vector<4x256xf32>
    %186 = arith.mulf %184, %185 : vector<4x256xf32>
    %187 = arith.addf %156, %186 : vector<4x256xf32>
    %c0_50 = arith.constant 0 : index
    %c14 = arith.constant 14 : index
    %188 = vector.load %arg5[%c0_50, %c14] : memref<4x49xf32, #tpu.memory_space<vmem>>, vector<4x1xf32>
    %189 = vector.broadcast %188 : vector<4x1xf32> to vector<4x256xf32>
    %190 = arith.mulf %189, %109 : vector<4x256xf32>
    %c0_51 = arith.constant 0 : index
    %c15 = arith.constant 15 : index
    %191 = vector.load %arg5[%c0_51, %c15] : memref<4x49xf32, #tpu.memory_space<vmem>>, vector<4x1xf32>
    %192 = vector.broadcast %191 : vector<4x1xf32> to vector<4x256xf32>
    %193 = arith.mulf %192, %112 : vector<4x256xf32>
    %194 = arith.addf %190, %193 : vector<4x256xf32>
    %c0_52 = arith.constant 0 : index
    %c16 = arith.constant 16 : index
    %195 = vector.load %arg5[%c0_52, %c16] : memref<4x49xf32, #tpu.memory_space<vmem>>, vector<4x1xf32>
    %196 = vector.broadcast %195 : vector<4x1xf32> to vector<4x256xf32>
    %197 = arith.mulf %196, %115 : vector<4x256xf32>
    %198 = arith.addf %194, %197 : vector<4x256xf32>
    %c0_53 = arith.constant 0 : index
    %c17 = arith.constant 17 : index
    %199 = vector.load %arg5[%c0_53, %c17] : memref<4x49xf32, #tpu.memory_space<vmem>>, vector<4x1xf32>
    %200 = vector.broadcast %199 : vector<4x1xf32> to vector<4x256xf32>
    %201 = arith.mulf %200, %53 : vector<4x256xf32>
    %202 = arith.addf %198, %201 : vector<4x256xf32>
    %c0_54 = arith.constant 0 : index
    %c18 = arith.constant 18 : index
    %203 = vector.load %arg5[%c0_54, %c18] : memref<4x49xf32, #tpu.memory_space<vmem>>, vector<4x1xf32>
    %204 = vector.broadcast %203 : vector<4x1xf32> to vector<4x256xf32>
    %205 = arith.mulf %204, %118 : vector<4x256xf32>
    %206 = arith.addf %202, %205 : vector<4x256xf32>
    %c0_55 = arith.constant 0 : index
    %c19 = arith.constant 19 : index
    %207 = vector.load %arg5[%c0_55, %c19] : memref<4x49xf32, #tpu.memory_space<vmem>>, vector<4x1xf32>
    %208 = vector.broadcast %207 : vector<4x1xf32> to vector<4x256xf32>
    %209 = arith.mulf %208, %121 : vector<4x256xf32>
    %210 = arith.addf %206, %209 : vector<4x256xf32>
    %c0_56 = arith.constant 0 : index
    %c20 = arith.constant 20 : index
    %211 = vector.load %arg5[%c0_56, %c20] : memref<4x49xf32, #tpu.memory_space<vmem>>, vector<4x1xf32>
    %212 = vector.broadcast %211 : vector<4x1xf32> to vector<4x256xf32>
    %213 = arith.mulf %212, %124 : vector<4x256xf32>
    %214 = arith.addf %210, %213 : vector<4x256xf32>
    %c16_i32 = arith.constant 16 : i32
    %215 = tpu.dynamic_rotate %214 by %c16_i32 dim 1 : vector<4x256xf32>, i32 -> vector<4x256xf32>
    %216 = vector.broadcast %74 : vector<1x256xf32> to vector<4x256xf32>
    %217 = arith.mulf %215, %216 : vector<4x256xf32>
    %218 = arith.addf %187, %217 : vector<4x256xf32>
    %c0_57 = arith.constant 0 : index
    %c21 = arith.constant 21 : index
    %219 = vector.load %arg5[%c0_57, %c21] : memref<4x49xf32, #tpu.memory_space<vmem>>, vector<4x1xf32>
    %220 = vector.broadcast %219 : vector<4x1xf32> to vector<4x256xf32>
    %221 = arith.mulf %220, %109 : vector<4x256xf32>
    %c0_58 = arith.constant 0 : index
    %c22 = arith.constant 22 : index
    %222 = vector.load %arg5[%c0_58, %c22] : memref<4x49xf32, #tpu.memory_space<vmem>>, vector<4x1xf32>
    %223 = vector.broadcast %222 : vector<4x1xf32> to vector<4x256xf32>
    %224 = arith.mulf %223, %112 : vector<4x256xf32>
    %225 = arith.addf %221, %224 : vector<4x256xf32>
    %c0_59 = arith.constant 0 : index
    %c23 = arith.constant 23 : index
    %226 = vector.load %arg5[%c0_59, %c23] : memref<4x49xf32, #tpu.memory_space<vmem>>, vector<4x1xf32>
    %227 = vector.broadcast %226 : vector<4x1xf32> to vector<4x256xf32>
    %228 = arith.mulf %227, %115 : vector<4x256xf32>
    %229 = arith.addf %225, %228 : vector<4x256xf32>
    %c0_60 = arith.constant 0 : index
    %c24 = arith.constant 24 : index
    %230 = vector.load %arg5[%c0_60, %c24] : memref<4x49xf32, #tpu.memory_space<vmem>>, vector<4x1xf32>
    %231 = vector.broadcast %230 : vector<4x1xf32> to vector<4x256xf32>
    %232 = arith.mulf %231, %53 : vector<4x256xf32>
    %233 = arith.addf %229, %232 : vector<4x256xf32>
    %c0_61 = arith.constant 0 : index
    %c25 = arith.constant 25 : index
    %234 = vector.load %arg5[%c0_61, %c25] : memref<4x49xf32, #tpu.memory_space<vmem>>, vector<4x1xf32>
    %235 = vector.broadcast %234 : vector<4x1xf32> to vector<4x256xf32>
    %236 = arith.mulf %235, %118 : vector<4x256xf32>
    %237 = arith.addf %233, %236 : vector<4x256xf32>
    %c0_62 = arith.constant 0 : index
    %c26 = arith.constant 26 : index
    %238 = vector.load %arg5[%c0_62, %c26] : memref<4x49xf32, #tpu.memory_space<vmem>>, vector<4x1xf32>
    %239 = vector.broadcast %238 : vector<4x1xf32> to vector<4x256xf32>
    %240 = arith.mulf %239, %121 : vector<4x256xf32>
    %241 = arith.addf %237, %240 : vector<4x256xf32>
    %c0_63 = arith.constant 0 : index
    %c27 = arith.constant 27 : index
    %242 = vector.load %arg5[%c0_63, %c27] : memref<4x49xf32, #tpu.memory_space<vmem>>, vector<4x1xf32>
    %243 = vector.broadcast %242 : vector<4x1xf32> to vector<4x256xf32>
    %244 = arith.mulf %243, %124 : vector<4x256xf32>
    %245 = arith.addf %241, %244 : vector<4x256xf32>
    %246 = arith.addf %218, %245 : vector<4x256xf32>
    %c0_64 = arith.constant 0 : index
    %c28 = arith.constant 28 : index
    %247 = vector.load %arg5[%c0_64, %c28] : memref<4x49xf32, #tpu.memory_space<vmem>>, vector<4x1xf32>
    %248 = vector.broadcast %247 : vector<4x1xf32> to vector<4x256xf32>
    %249 = arith.mulf %248, %109 : vector<4x256xf32>
    %c0_65 = arith.constant 0 : index
    %c29 = arith.constant 29 : index
    %250 = vector.load %arg5[%c0_65, %c29] : memref<4x49xf32, #tpu.memory_space<vmem>>, vector<4x1xf32>
    %251 = vector.broadcast %250 : vector<4x1xf32> to vector<4x256xf32>
    %252 = arith.mulf %251, %112 : vector<4x256xf32>
    %253 = arith.addf %249, %252 : vector<4x256xf32>
    %c0_66 = arith.constant 0 : index
    %c30 = arith.constant 30 : index
    %254 = vector.load %arg5[%c0_66, %c30] : memref<4x49xf32, #tpu.memory_space<vmem>>, vector<4x1xf32>
    %255 = vector.broadcast %254 : vector<4x1xf32> to vector<4x256xf32>
    %256 = arith.mulf %255, %115 : vector<4x256xf32>
    %257 = arith.addf %253, %256 : vector<4x256xf32>
    %c0_67 = arith.constant 0 : index
    %c31 = arith.constant 31 : index
    %258 = vector.load %arg5[%c0_67, %c31] : memref<4x49xf32, #tpu.memory_space<vmem>>, vector<4x1xf32>
    %259 = vector.broadcast %258 : vector<4x1xf32> to vector<4x256xf32>
    %260 = arith.mulf %259, %53 : vector<4x256xf32>
    %261 = arith.addf %257, %260 : vector<4x256xf32>
    %c0_68 = arith.constant 0 : index
    %c32 = arith.constant 32 : index
    %262 = vector.load %arg5[%c0_68, %c32] : memref<4x49xf32, #tpu.memory_space<vmem>>, vector<4x1xf32>
    %263 = vector.broadcast %262 : vector<4x1xf32> to vector<4x256xf32>
    %264 = arith.mulf %263, %118 : vector<4x256xf32>
    %265 = arith.addf %261, %264 : vector<4x256xf32>
    %c0_69 = arith.constant 0 : index
    %c33 = arith.constant 33 : index
    %266 = vector.load %arg5[%c0_69, %c33] : memref<4x49xf32, #tpu.memory_space<vmem>>, vector<4x1xf32>
    %267 = vector.broadcast %266 : vector<4x1xf32> to vector<4x256xf32>
    %268 = arith.mulf %267, %121 : vector<4x256xf32>
    %269 = arith.addf %265, %268 : vector<4x256xf32>
    %c0_70 = arith.constant 0 : index
    %c34 = arith.constant 34 : index
    %270 = vector.load %arg5[%c0_70, %c34] : memref<4x49xf32, #tpu.memory_space<vmem>>, vector<4x1xf32>
    %271 = vector.broadcast %270 : vector<4x1xf32> to vector<4x256xf32>
    %272 = arith.mulf %271, %124 : vector<4x256xf32>
    %273 = arith.addf %269, %272 : vector<4x256xf32>
    %c240_i32 = arith.constant 240 : i32
    %274 = tpu.dynamic_rotate %273 by %c240_i32 dim 1 : vector<4x256xf32>, i32 -> vector<4x256xf32>
    %275 = vector.broadcast %70 : vector<1x256xf32> to vector<4x256xf32>
    %276 = arith.mulf %274, %275 : vector<4x256xf32>
    %277 = arith.addf %246, %276 : vector<4x256xf32>
    %c0_71 = arith.constant 0 : index
    %c35 = arith.constant 35 : index
    %278 = vector.load %arg5[%c0_71, %c35] : memref<4x49xf32, #tpu.memory_space<vmem>>, vector<4x1xf32>
    %279 = vector.broadcast %278 : vector<4x1xf32> to vector<4x256xf32>
    %280 = arith.mulf %279, %109 : vector<4x256xf32>
    %c0_72 = arith.constant 0 : index
    %c36 = arith.constant 36 : index
    %281 = vector.load %arg5[%c0_72, %c36] : memref<4x49xf32, #tpu.memory_space<vmem>>, vector<4x1xf32>
    %282 = vector.broadcast %281 : vector<4x1xf32> to vector<4x256xf32>
    %283 = arith.mulf %282, %112 : vector<4x256xf32>
    %284 = arith.addf %280, %283 : vector<4x256xf32>
    %c0_73 = arith.constant 0 : index
    %c37 = arith.constant 37 : index
    %285 = vector.load %arg5[%c0_73, %c37] : memref<4x49xf32, #tpu.memory_space<vmem>>, vector<4x1xf32>
    %286 = vector.broadcast %285 : vector<4x1xf32> to vector<4x256xf32>
    %287 = arith.mulf %286, %115 : vector<4x256xf32>
    %288 = arith.addf %284, %287 : vector<4x256xf32>
    %c0_74 = arith.constant 0 : index
    %c38 = arith.constant 38 : index
    %289 = vector.load %arg5[%c0_74, %c38] : memref<4x49xf32, #tpu.memory_space<vmem>>, vector<4x1xf32>
    %290 = vector.broadcast %289 : vector<4x1xf32> to vector<4x256xf32>
    %291 = arith.mulf %290, %53 : vector<4x256xf32>
    %292 = arith.addf %288, %291 : vector<4x256xf32>
    %c0_75 = arith.constant 0 : index
    %c39 = arith.constant 39 : index
    %293 = vector.load %arg5[%c0_75, %c39] : memref<4x49xf32, #tpu.memory_space<vmem>>, vector<4x1xf32>
    %294 = vector.broadcast %293 : vector<4x1xf32> to vector<4x256xf32>
    %295 = arith.mulf %294, %118 : vector<4x256xf32>
    %296 = arith.addf %292, %295 : vector<4x256xf32>
    %c0_76 = arith.constant 0 : index
    %c40 = arith.constant 40 : index
    %297 = vector.load %arg5[%c0_76, %c40] : memref<4x49xf32, #tpu.memory_space<vmem>>, vector<4x1xf32>
    %298 = vector.broadcast %297 : vector<4x1xf32> to vector<4x256xf32>
    %299 = arith.mulf %298, %121 : vector<4x256xf32>
    %300 = arith.addf %296, %299 : vector<4x256xf32>
    %c0_77 = arith.constant 0 : index
    %c41 = arith.constant 41 : index
    %301 = vector.load %arg5[%c0_77, %c41] : memref<4x49xf32, #tpu.memory_space<vmem>>, vector<4x1xf32>
    %302 = vector.broadcast %301 : vector<4x1xf32> to vector<4x256xf32>
    %303 = arith.mulf %302, %124 : vector<4x256xf32>
    %304 = arith.addf %300, %303 : vector<4x256xf32>
    %c224_i32 = arith.constant 224 : i32
    %305 = tpu.dynamic_rotate %304 by %c224_i32 dim 1 : vector<4x256xf32>, i32 -> vector<4x256xf32>
    %306 = vector.broadcast %86 : vector<1x256xf32> to vector<4x256xf32>
    %307 = arith.mulf %305, %306 : vector<4x256xf32>
    %308 = arith.addf %277, %307 : vector<4x256xf32>
    %c0_78 = arith.constant 0 : index
    %c42 = arith.constant 42 : index
    %309 = vector.load %arg5[%c0_78, %c42] : memref<4x49xf32, #tpu.memory_space<vmem>>, vector<4x1xf32>
    %310 = vector.broadcast %309 : vector<4x1xf32> to vector<4x256xf32>
    %311 = arith.mulf %310, %109 : vector<4x256xf32>
    %c0_79 = arith.constant 0 : index
    %c43 = arith.constant 43 : index
    %312 = vector.load %arg5[%c0_79, %c43] : memref<4x49xf32, #tpu.memory_space<vmem>>, vector<4x1xf32>
    %313 = vector.broadcast %312 : vector<4x1xf32> to vector<4x256xf32>
    %314 = arith.mulf %313, %112 : vector<4x256xf32>
    %315 = arith.addf %311, %314 : vector<4x256xf32>
    %c0_80 = arith.constant 0 : index
    %c44 = arith.constant 44 : index
    %316 = vector.load %arg5[%c0_80, %c44] : memref<4x49xf32, #tpu.memory_space<vmem>>, vector<4x1xf32>
    %317 = vector.broadcast %316 : vector<4x1xf32> to vector<4x256xf32>
    %318 = arith.mulf %317, %115 : vector<4x256xf32>
    %319 = arith.addf %315, %318 : vector<4x256xf32>
    %c0_81 = arith.constant 0 : index
    %c45 = arith.constant 45 : index
    %320 = vector.load %arg5[%c0_81, %c45] : memref<4x49xf32, #tpu.memory_space<vmem>>, vector<4x1xf32>
    %321 = vector.broadcast %320 : vector<4x1xf32> to vector<4x256xf32>
    %322 = arith.mulf %321, %53 : vector<4x256xf32>
    %323 = arith.addf %319, %322 : vector<4x256xf32>
    %c0_82 = arith.constant 0 : index
    %c46 = arith.constant 46 : index
    %324 = vector.load %arg5[%c0_82, %c46] : memref<4x49xf32, #tpu.memory_space<vmem>>, vector<4x1xf32>
    %325 = vector.broadcast %324 : vector<4x1xf32> to vector<4x256xf32>
    %326 = arith.mulf %325, %118 : vector<4x256xf32>
    %327 = arith.addf %323, %326 : vector<4x256xf32>
    %c0_83 = arith.constant 0 : index
    %c47 = arith.constant 47 : index
    %328 = vector.load %arg5[%c0_83, %c47] : memref<4x49xf32, #tpu.memory_space<vmem>>, vector<4x1xf32>
    %329 = vector.broadcast %328 : vector<4x1xf32> to vector<4x256xf32>
    %330 = arith.mulf %329, %121 : vector<4x256xf32>
    %331 = arith.addf %327, %330 : vector<4x256xf32>
    %c0_84 = arith.constant 0 : index
    %c48 = arith.constant 48 : index
    %332 = vector.load %arg5[%c0_84, %c48] : memref<4x49xf32, #tpu.memory_space<vmem>>, vector<4x1xf32>
    %333 = vector.broadcast %332 : vector<4x1xf32> to vector<4x256xf32>
    %334 = arith.mulf %333, %124 : vector<4x256xf32>
    %335 = arith.addf %331, %334 : vector<4x256xf32>
    %c208_i32 = arith.constant 208 : i32
    %336 = tpu.dynamic_rotate %335 by %c208_i32 dim 1 : vector<4x256xf32>, i32 -> vector<4x256xf32>
    %337 = vector.broadcast %102 : vector<1x256xf32> to vector<4x256xf32>
    %338 = arith.mulf %336, %337 : vector<4x256xf32>
    %339 = arith.addf %308, %338 : vector<4x256xf32>
    %340 = vector.extract_strided_slice %339 {offsets = [0, 0], sizes = [2, 256], strides = [1, 1]} : vector<4x256xf32> to vector<2x256xf32>
    %341 = vector.extract_strided_slice %339 {offsets = [2, 0], sizes = [2, 256], strides = [1, 1]} : vector<4x256xf32> to vector<2x256xf32>
    %342 = arith.addf %340, %341 : vector<2x256xf32>
    %c0_85 = arith.constant 0 : index
    %343 = memref.load %arg6[%c0_85] : memref<2xf32, #tpu.memory_space<smem>>
    %c1_86 = arith.constant 1 : index
    %344 = memref.load %arg6[%c1_86] : memref<2xf32, #tpu.memory_space<smem>>
    %345 = vector.shape_cast %342 : vector<2x256xf32> to vector<1x2x256xf32>
    %cst_87 = arith.constant dense<0.000000e+00> : vector<1xf32>
    %346 = vector.multi_reduction <add>, %345, %cst_87 [1, 2] : vector<1x2x256xf32> to vector<1xf32>
    %347 = vector.shape_cast %346 : vector<1xf32> to vector<1x1x1xf32>
    %348 = vector.extract %347[0, 0, 0] : f32 from vector<1x1x1xf32>
    %cst_88 = arith.constant 5.120000e+02 : f32
    %349 = arith.divf %348, %cst_88 : f32
    %350 = vector.broadcast %349 : f32 to vector<2x256xf32>
    %351 = arith.subf %342, %350 : vector<2x256xf32>
    %352 = arith.mulf %351, %351 : vector<2x256xf32>
    %353 = vector.shape_cast %352 : vector<2x256xf32> to vector<1x2x256xf32>
    %cst_89 = arith.constant dense<0.000000e+00> : vector<1xf32>
    %354 = vector.multi_reduction <add>, %353, %cst_89 [1, 2] : vector<1x2x256xf32> to vector<1xf32>
    %355 = vector.shape_cast %354 : vector<1xf32> to vector<1x1x1xf32>
    %356 = vector.extract %355[0, 0, 0] : f32 from vector<1x1x1xf32>
    %cst_90 = arith.constant 5.120000e+02 : f32
    %357 = arith.divf %356, %cst_90 : f32
    %cst_91 = arith.constant 9.99999974E-6 : f32
    %358 = arith.addf %357, %cst_91 : f32
    %359 = math.rsqrt %358 : f32
    %360 = vector.broadcast %359 : f32 to vector<2x256xf32>
    %361 = arith.mulf %351, %360 : vector<2x256xf32>
    %362 = vector.broadcast %343 : f32 to vector<2x256xf32>
    %363 = arith.mulf %361, %362 : vector<2x256xf32>
    %364 = vector.broadcast %344 : f32 to vector<2x256xf32>
    %365 = arith.addf %363, %364 : vector<2x256xf32>
    %366 = arith.negf %365 : vector<2x256xf32>
    %367 = math.exp %366 : vector<2x256xf32>
    %cst_92 = arith.constant 1.000000e+00 : f32
    %368 = vector.broadcast %cst_92 : f32 to vector<2x256xf32>
    %369 = arith.addf %368, %367 : vector<2x256xf32>
    %370 = arith.divf %368, %369 : vector<2x256xf32>
    %371 = vector.shape_cast %370 : vector<2x256xf32> to vector<2x1x256xf32>
    %372 = vector.broadcast %371 : vector<2x1x256xf32> to vector<2x32x256xf32>
    %373 = arith.mulf %48, %372 : vector<2x32x256xf32>
    %c0_93 = arith.constant 0 : index
    %c0_94 = arith.constant 0 : index
    %c0_95 = arith.constant 0 : index
    %374 = vector.load %arg7[%c0_93, %c0_94, %c0_95] : memref<2x32x256xf32, #tpu.memory_space<vmem>>, vector<2x32x256xf32>
    tpu.vector_store %arg7[%c0_93, %c0_94, %c0_95], %373 {strides = array<i32>} : memref<2x32x256xf32, #tpu.memory_space<vmem>>, vector<2x32x256xf32>,
    return
  }
}

</mosaic_0001>

<llo_original>
// kernel: tpu_custom_call.1
$region0: #{tpu_custom_call.1}
  #allocation0 [shape = 'u32[]', space=smem, size = 0x4, offset = 0x4, fixed_abs, tag = 'smem constant byte address 0x4 - core index']
  #allocation1 [shape = 'u32[144,128]{1,0:T(1,128)}', space=vmem, size = 0x12000, scoped, tag = 'internal scratch']
  %s0 = inlined_call_operand.hbm [shape: f32[2,32,256], index: 0, kind: input, shape index: {}]
  %s1 = inlined_call_operand.hbm [shape: f32[2,32], index: 1, kind: input, shape index: {}]
  %s2 = inlined_call_operand.vmem [shape: f32[2], index: 2, kind: input, shape index: {}]
  %s3 = inlined_call_operand.vmem [shape: f32[2,32], index: 3, kind: input, shape index: {}]
  %s4 = inlined_call_operand.hbm [shape: f32[1,32], index: 4, kind: input, shape index: {}]
  %s5 = inlined_call_operand.vmem [shape: f32[4,49], index: 5, kind: input, shape index: {}]
  %s6 = inlined_call_operand.vmem [shape: f32[2], index: 6, kind: input, shape index: {}]
  %s7 = inlined_call_operand.hbm [shape: f32[2,32,256], index: 7, kind: output, shape index: {}]
  %s8 = sld [smem:[#allocation0]]
  $region58: #{tpu_custom_call.1} parent=0
    _
  %s10 = ssub.s32 1, %s8
  %s11 = scalar_select 0, %s10, %s8
  $region1: #{tpu_custom_call.1} parent=0
    #allocation2 [shape = 'u8[65536]{0}', space=vmem, size = 0x10000, scoped, tag = 'input window, operand 0, single buffered']
    #allocation3 [shape = 's32[1]{0}', space=sflag, size = 0x4, scoped, tag = 'scoped memory for tpu_custom_call.1']
    #allocation4 [shape = 's32[1]{0}', space=sflag, size = 0x4, scoped, tag = 'scoped memory for tpu_custom_call.1']
    #allocation5 [shape = 's32[1]{0}', space=sflag, size = 0x4, scoped, tag = 'scoped memory for tpu_custom_call.1']
    #allocation6 [shape = 'u8[1024]{0}', space=vmem, size = 0x400, scoped, tag = 'input window, operand 1, single buffered']
    #allocation7 [shape = 's32[1]{0}', space=sflag, size = 0x4, scoped, tag = 'scoped memory for tpu_custom_call.1']
    #allocation8 [shape = 'u8[512]{0}', space=smem, size = 0x200, scoped, tag = 'input window, operand 2, single buffered']
    #allocation9 [shape = 'u8[512]{0}', space=vmem, size = 0x400, scoped, tag = 'input window, operand 4, single buffered']
    #allocation10 [shape = 'u8[512]{0}', space=smem, size = 0x200, scoped, tag = 'input window, operand 6, single buffered']
    #allocation11 [shape = 's32[1]{0}', space=sflag, size = 0x4, scoped, tag = 'scoped memory for tpu_custom_call.1']
    #allocation12 [shape = 'u8[65536]{0}', space=vmem, size = 0x10000, scoped, tag = 'output window, operand 0, single buffered']
    %12 = vsyncpa [#allocation3], 0
    %13 = vsyncpa [#allocation7], 0
    %14 = vsyncpa [#allocation5], 0
    %15 = vsyncpa [#allocation11], 0
    %16 = vsyncpa [#allocation4], 0
    // Predicated region
    $region2: #{tpu_custom_call.1} parent=1 // pred_check
      _
    $region3: #{tpu_custom_call.1} parent=1 // pred_check_branch
      %18 = sbr.rel (0) target = $region5
    $region4: #{tpu_custom_call.1} parent=1 // pred_region
      %s20 = ssub.s32 2048, 2048
      %21 = vsyncadd [#allocation3], %s20
      %s22 = sshll.u32 [#allocation2], 4
      %s23 = int_to_ptr.vmem [resolvable:$true] %s22
      %28 = dma.hbm_to_vmem [thread:$0]  %s0, 2048, %s23, [#allocation3], 256, 256, 16
    $region5: #{tpu_custom_call.1} parent=1 // pred_fallthru
      _
    // Predicated region
    $region6: #{tpu_custom_call.1} parent=1 // pred_check
      _
    $region7: #{tpu_custom_call.1} parent=1 // pred_check_branch
      %30 = sbr.rel (0) target = $region9
    $region8: #{tpu_custom_call.1} parent=1 // pred_region
      %s32 = ssub.s32 32, 32
      %33 = vsyncadd [#allocation7], %s32
      %s35 = sshll.u32 [#allocation6], 4
      %s36 = int_to_ptr.vmem [resolvable:$true] %s35
      %38 = dma.hbm_to_vmem [thread:$0]  %s1, 32, %s36, [#allocation7]
    $region9: #{tpu_custom_call.1} parent=1 // pred_fallthru
      _
    // Predicated region
    $region10: #{tpu_custom_call.1} parent=1 // pred_check
      _
    $region11: #{tpu_custom_call.1} parent=1 // pred_check_branch
      %40 = sbr.rel (0) target = $region13
    $region12: #{tpu_custom_call.1} parent=1 // pred_region
      %s42 = ssub.s32 16, 16
      %43 = vsyncadd [#allocation5], %s42
      %s45 = sshll.u32 %s2, 4
      %s46 = int_to_ptr.vmem [resolvable:$true] %s45
      %48 = dma.vmem_to_smem %s46, 16, [#allocation8], [#allocation5]
    $region13: #{tpu_custom_call.1} parent=1 // pred_fallthru
      _
    // Predicated region
    $region14: #{tpu_custom_call.1} parent=1 // pred_check
      _
    $region15: #{tpu_custom_call.1} parent=1 // pred_check_branch
      %50 = sbr.rel (0) target = $region17
    $region16: #{tpu_custom_call.1} parent=1 // pred_region
      _
    $region17: #{tpu_custom_call.1} parent=1 // pred_fallthru
      _
    // Predicated region
    $region18: #{tpu_custom_call.1} parent=1 // pred_check
      _
    $region19: #{tpu_custom_call.1} parent=1 // pred_check_branch
      %52 = sbr.rel (0) target = $region21
    $region20: #{tpu_custom_call.1} parent=1 // pred_region
      %s54 = ssub.s32 16, 16
      %55 = vsyncadd [#allocation7], %s54
      %s57 = sshll.u32 [#allocation9], 4
      %s58 = int_to_ptr.vmem [resolvable:$true] %s57
      %60 = dma.hbm_to_vmem [thread:$0]  %s4, 16, %s58, [#allocation7]
    $region21: #{tpu_custom_call.1} parent=1 // pred_fallthru
      _
    // Predicated region
    $region22: #{tpu_custom_call.1} parent=1 // pred_check
      _
    $region23: #{tpu_custom_call.1} parent=1 // pred_check_branch
      %62 = sbr.rel (0) target = $region25
    $region24: #{tpu_custom_call.1} parent=1 // pred_region
      _
    $region25: #{tpu_custom_call.1} parent=1 // pred_fallthru
      _
    // Predicated region
    $region26: #{tpu_custom_call.1} parent=1 // pred_check
      _
    $region27: #{tpu_custom_call.1} parent=1 // pred_check_branch
      %64 = sbr.rel (0) target = $region29
    $region28: #{tpu_custom_call.1} parent=1 // pred_region
      %s66 = ssub.s32 16, 16
      %67 = vsyncadd [#allocation11], %s66
      %s69 = sshll.u32 %s6, 4
      %s70 = int_to_ptr.vmem [resolvable:$true] %s69
      %72 = dma.vmem_to_smem %s70, 16, [#allocation10], [#allocation11]
    $region29: #{tpu_custom_call.1} parent=1 // pred_fallthru
      _
    // Predicated region
    $region30: #{tpu_custom_call.1} parent=1 // pred_check
      _
    $region31: #{tpu_custom_call.1} parent=1 // pred_check_branch
      %74 = sbr.rel (0) target = $region33
    $region32: #{tpu_custom_call.1} parent=1 // pred_region
      %75 = dma.done [#allocation3], 2048
    $region33: #{tpu_custom_call.1} parent=1 // pred_fallthru
      _
    // Predicated region
    $region34: #{tpu_custom_call.1} parent=1 // pred_check
      _
    $region35: #{tpu_custom_call.1} parent=1 // pred_check_branch
      %77 = sbr.rel (0) target = $region37
    $region36: #{tpu_custom_call.1} parent=1 // pred_region
      %78 = dma.done [#allocation7], 32
    $region37: #{tpu_custom_call.1} parent=1 // pred_fallthru
      _
    // Predicated region
    $region38: #{tpu_custom_call.1} parent=1 // pred_check
      _
    $region39: #{tpu_custom_call.1} parent=1 // pred_check_branch
      %80 = sbr.rel (0) target = $region41
    $region40: #{tpu_custom_call.1} parent=1 // pred_region
      %81 = dma.done [#allocation5], 16
    $region41: #{tpu_custom_call.1} parent=1 // pred_fallthru
      _
    // Predicated region
    $region42: #{tpu_custom_call.1} parent=1 // pred_check
      _
    $region43: #{tpu_custom_call.1} parent=1 // pred_check_branch
      %83 = sbr.rel (0) target = $region45
    $region44: #{tpu_custom_call.1} parent=1 // pred_region
      %84 = dma.done [#allocation7], 16
    $region45: #{tpu_custom_call.1} parent=1 // pred_fallthru
      _
    // Predicated region
    $region46: #{tpu_custom_call.1} parent=1 // pred_check
      _
    $region47: #{tpu_custom_call.1} parent=1 // pred_check_branch
      %86 = sbr.rel (0) target = $region49
    $region48: #{tpu_custom_call.1} parent=1 // pred_region
      %87 = dma.done [#allocation11], 16
    $region49: #{tpu_custom_call.1} parent=1 // pred_fallthru
      _
    %88 = sfence
    %v89 = vld [vmem:[#allocation2] sm:$0xff]
    %v90 = vld [vmem:[#allocation2 + $0x8] sm:$0xff]
    %v91 = vld [vmem:[#allocation2 + $0x10] sm:$0xff]
    %v92 = vld [vmem:[#allocation2 + $0x18] sm:$0xff]
    %v93 = vld [vmem:[#allocation2 + $0x20] sm:$0xff]
    %v94 = vld [vmem:[#allocation2 + $0x28] sm:$0xff]
    %v95 = vld [vmem:[#allocation2 + $0x30] sm:$0xff]
    %v96 = vld [vmem:[#allocation2 + $0x38] sm:$0xff]
    %v97 = vld [vmem:[#allocation2 + $0x40] sm:$0xff]
    %v98 = vld [vmem:[#allocation2 + $0x48] sm:$0xff]
    %v99 = vld [vmem:[#allocation2 + $0x50] sm:$0xff]
    %v100 = vld [vmem:[#allocation2 + $0x58] sm:$0xff]
    %v101 = vld [vmem:[#allocation2 + $0x60] sm:$0xff]
    %v102 = vld [vmem:[#allocation2 + $0x68] sm:$0xff]
    %v103 = vld [vmem:[#allocation2 + $0x70] sm:$0xff]
    %v104 = vld [vmem:[#allocation2 + $0x78] sm:$0xff]
    %v105 = vadd.f32 %v89, %v90
    %106 = vadd.xlane.f32.xlu0 %v105
    %v107 = vpop.xlane.xlu0 %106
    %v108 = vadd.f32 %v91, %v92
    %109 = vadd.xlane.f32.xlu0 %v108
    %v110 = vpop.xlane.xlu0 %109
    %v111 = vadd.f32 %v93, %v94
    %112 = vadd.xlane.f32.xlu0 %v111
    %v113 = vpop.xlane.xlu0 %112
    %v114 = vadd.f32 %v95, %v96
    %115 = vadd.xlane.f32.xlu0 %v114
    %v116 = vpop.xlane.xlu0 %115
    %v117 = vadd.f32 %v97, %v98
    %118 = vadd.xlane.f32.xlu0 %v117
    %v119 = vpop.xlane.xlu0 %118
    %v120 = vadd.f32 %v99, %v100
    %121 = vadd.xlane.f32.xlu0 %v120
    %v122 = vpop.xlane.xlu0 %121
    %v123 = vadd.f32 %v101, %v102
    %124 = vadd.xlane.f32.xlu0 %v123
    %v125 = vpop.xlane.xlu0 %124
    %v126 = vadd.f32 %v103, %v104
    %127 = vadd.xlane.f32.xlu0 %v126
    %v128 = vpop.xlane.xlu0 %127
    %v129 = vrcp.pop 256.0
    %v130 = vmul.f32 %v107, %v129
    %v131 = vmul.f32 %v110, %v129
    %v132 = vmul.f32 %v113, %v129
    %v133 = vmul.f32 %v116, %v129
    %v134 = vmul.f32 %v119, %v129
    %v135 = vmul.f32 %v122, %v129
    %v136 = vmul.f32 %v125, %v129
    %v137 = vmul.f32 %v128, %v129
    %v138 = vmax.f32 %v89, %v90
    %139 = vmax.xlane.f32.xlu0 %v138
    %v140 = vpop.xlane.xlu0 %139
    %v141 = vmax.f32 %v91, %v92
    %142 = vmax.xlane.f32.xlu0 %v141
    %v143 = vpop.xlane.xlu0 %142
    %v144 = vmax.f32 %v93, %v94
    %145 = vmax.xlane.f32.xlu0 %v144
    %v146 = vpop.xlane.xlu0 %145
    %v147 = vmax.f32 %v95, %v96
    %148 = vmax.xlane.f32.xlu0 %v147
    %v149 = vpop.xlane.xlu0 %148
    %v150 = vmax.f32 %v97, %v98
    %151 = vmax.xlane.f32.xlu0 %v150
    %v152 = vpop.xlane.xlu0 %151
    %v153 = vmax.f32 %v99, %v100
    %154 = vmax.xlane.f32.xlu0 %v153
    %v155 = vpop.xlane.xlu0 %154
    %v156 = vmax.f32 %v101, %v102
    %157 = vmax.xlane.f32.xlu0 %v156
    %v158 = vpop.xlane.xlu0 %157
    %v159 = vmax.f32 %v103, %v104
    %160 = vmax.xlane.f32.xlu0 %v159
    %v161 = vpop.xlane.xlu0 %160
    %v170 = vlaneseq
    %v171 = vand.u32 %v170, 127
    %v172 = vlaneseq
    %v173 = vshrl.u32 %v172, 7
    %v174 = vsub.s32 %v171, %v173
    %v175 = vrot.slane %v130, %v174
    %v176 = vadd.s32 %v171, 4294967288
    %v177 = vlaneseq
    %v178 = vshrl.u32 %v177, 7
    %v179 = vsub.s32 %v176, %v178
    %v180 = vrot.slane %v131, %v179
    %vm181 = vcmask 130112
    %v182 = vsel %vm181, %v180, %v175
    %v183 = vadd.s32 %v171, 4294967280
    %v184 = vlaneseq
    %v185 = vshrl.u32 %v184, 7
    %v186 = vsub.s32 %v183, %v185
    %v187 = vrot.slane %v132, %v186
    %vm188 = vcmask 195712
    %v189 = vsel %vm188, %v187, %v182
    %v190 = vadd.s32 %v171, 4294967272
    %v191 = vlaneseq
    %v192 = vshrl.u32 %v191, 7
    %v193 = vsub.s32 %v190, %v192
    %v194 = vrot.slane %v133, %v193
    %vm195 = vcmask 261312
    %v196 = vsel %vm195, %v194, %v189
    %v197 = vlaneseq
    %v198 = vshrl.u32 %v197, 7
    %v199 = vsub.s32 %v171, %v198
    %v200 = vrot.slane %v134, %v199
    %v201 = vlaneseq
    %v202 = vshrl.u32 %v201, 7
    %v203 = vsub.s32 %v176, %v202
    %v204 = vrot.slane %v135, %v203
    %v205 = vsel %vm181, %v204, %v200
    %v206 = vlaneseq
    %v207 = vshrl.u32 %v206, 7
    %v208 = vsub.s32 %v183, %v207
    %v209 = vrot.slane %v136, %v208
    %v210 = vsel %vm188, %v209, %v205
    %v211 = vlaneseq
    %v212 = vshrl.u32 %v211, 7
    %v213 = vsub.s32 %v190, %v212
    %v214 = vrot.slane %v137, %v213
    %v215 = vsel %vm195, %v214, %v210
    %vm216 = vcmask 1041409
    %v217 = vsel %vm216, %v215, %v196
    %v227 = vlaneseq
    %v228 = vshrl.u32 %v227, 7
    %v229 = vsub.s32 %v171, %v228
    %v230 = vrot.slane %v140, %v229
    %v231 = vlaneseq
    %v232 = vshrl.u32 %v231, 7
    %v233 = vsub.s32 %v176, %v232
    %v234 = vrot.slane %v143, %v233
    %v235 = vsel %vm181, %v234, %v230
    %v236 = vlaneseq
    %v237 = vshrl.u32 %v236, 7
    %v238 = vsub.s32 %v183, %v237
    %v239 = vrot.slane %v146, %v238
    %v240 = vsel %vm188, %v239, %v235
    %v241 = vlaneseq
    %v242 = vshrl.u32 %v241, 7
    %v243 = vsub.s32 %v190, %v242
    %v244 = vrot.slane %v149, %v243
    %v245 = vsel %vm195, %v244, %v240
    %v246 = vlaneseq
    %v247 = vshrl.u32 %v246, 7
    %v248 = vsub.s32 %v171, %v247
    %v249 = vrot.slane %v152, %v248
    %v250 = vlaneseq
    %v251 = vshrl.u32 %v250, 7
    %v252 = vsub.s32 %v176, %v251
    %v253 = vrot.slane %v155, %v252
    %v254 = vsel %vm181, %v253, %v249
    %v255 = vlaneseq
    %v256 = vshrl.u32 %v255, 7
    %v257 = vsub.s32 %v183, %v256
    %v258 = vrot.slane %v158, %v257
    %v259 = vsel %vm188, %v258, %v254
    %v260 = vlaneseq
    %v261 = vshrl.u32 %v260, 7
    %v262 = vsub.s32 %v190, %v261
    %v263 = vrot.slane %v161, %v262
    %v264 = vsel %vm195, %v263, %v259
    %vm265 = vcmask 1043459
    %v266 = vsel %vm265, %v264, %v245
    %vm268 = vcmask 1041408
    %v269 = vsel %vm268, %v217, %v266
    %v270 = vld [vmem:[#allocation9] sm:$0x1]
    %v271 = vld [vmem:[#allocation6] sm:$0x1]
    %v272 = vlaneseq
    %v273 = vshrl.u32 %v272, 7
    %v274 = vsub.s32 0, %v273
    %v275 = vrot.slane %v271, %v274
    %v276 = vmul.f32 %v269, %v275
    %vm277 = vcmask 257024
    %v278 = vsel %vm277, %v276, 0.0
    %279 = vadd.xlane.f32.xlu0 %v278
    %v280 = vpop.xlane.xlu0 %279
    %s281 = sld [smem:[#allocation8]]
    %v282 = vstv %s281
    %v283 = vadd.f32 %v280, %v282
    %v284 = vmax.f32 %v283, 0.0
    %v285 = vld [vmem:[%s3] sm:$0x1]
    %v286 = vlaneseq
    %v287 = vshrl.u32 %v286, 7
    %v288 = vsub.s32 0, %v287
    %v289 = vrot.slane %v285, %v288
    %v290 = vmul.f32 %v284, %v289
    %v292 = vlaneseq
    %v293 = vshrl.u32 %v292, 7
    %v294 = vsub.s32 0, %v293
    %v295 = vrot.slane %v270, %v294
    %v297 = vadd.f32 %v295, %v290
    %v298 = vld [vmem:[#allocation6 + $0x1] sm:$0x1]
    %v299 = vlaneseq
    %v300 = vshrl.u32 %v299, 7
    %v301 = vsub.s32 0, %v300
    %v302 = vrot.slane %v298, %v301
    %v303 = vmul.f32 %v269, %v302
    %v304 = vsel %vm277, %v303, 0.0
    %305 = vadd.xlane.f32.xlu0 %v304
    %v306 = vpop.xlane.xlu0 %305
    %s307 = sld [smem:[#allocation8 + $0x1]]
    %v308 = vstv %s307
    %v309 = vadd.f32 %v306, %v308
    %v310 = vmax.f32 %v309, 0.0
    %v311 = vld [vmem:[%s3 + $0x1] sm:$0x1]
    %v312 = vlaneseq
    %v313 = vshrl.u32 %v312, 7
    %v314 = vsub.s32 0, %v313
    %v315 = vrot.slane %v311, %v314
    %v316 = vmul.f32 %v310, %v315
    %v317 = vadd.f32 %v297, %v316
    %v319 = vrot.slane %v317, 2
    %v321 = vadd.f32 %v317, %v319
    %v322 = vxor.u32 %v321, 2147483648
    %v323 = vmul.f32 %v322, 1.442695
    %v324 = vpow.pop %v323
    %v325 = vadd.f32 %v324, 1.0
    %v326 = vrcp.pop %v325
    %v327 = vmul.f32 1.0, %v326
    %v328 = vlaneseq
    %v329 = vshrl.u32 %v328, 7
    %v330 = vsub.s32 0, %v329
    %v331 = vrot.slane %v327, %v330
    %333 = vbcast.lane.b32.xlu0 %v331, 256
    %v334 = vpop.permute.xlu0 %333
    %s336 = sor.u32 256, 8
    %337 = vbcast.lane.b32.xlu0 %v331, %s336
    %v338 = vpop.permute.xlu0 %337
    %s340 = sor.u32 256, 16
    %341 = vbcast.lane.b32.xlu0 %v331, %s340
    %v342 = vpop.permute.xlu0 %341
    %s344 = sor.u32 256, 24
    %345 = vbcast.lane.b32.xlu0 %v331, %s344
    %v346 = vpop.permute.xlu0 %345
    %v347 = vlaneseq
    %v348 = vshrl.u32 %v347, 7
    %v349 = vsub.s32 1, %v348
    %v350 = vrot.slane %v327, %v349
    %352 = vbcast.lane.b32.xlu0 %v350, 256
    %v353 = vpop.permute.xlu0 %352
    %s355 = sor.u32 256, 8
    %356 = vbcast.lane.b32.xlu0 %v350, %s355
    %v357 = vpop.permute.xlu0 %356
    %s359 = sor.u32 256, 16
    %360 = vbcast.lane.b32.xlu0 %v350, %s359
    %v361 = vpop.permute.xlu0 %360
    %s363 = sor.u32 256, 24
    %364 = vbcast.lane.b32.xlu0 %v350, %s363
    %v365 = vpop.permute.xlu0 %364
    %v366 = vmul.f32 %v89, %v334
    %v367 = vmul.f32 %v90, %v334
    %v368 = vmul.f32 %v91, %v338
    %v369 = vmul.f32 %v92, %v338
    %v370 = vmul.f32 %v93, %v342
    %v371 = vmul.f32 %v94, %v342
    %v372 = vmul.f32 %v95, %v346
    %v373 = vmul.f32 %v96, %v346
    %v374 = vmul.f32 %v97, %v353
    %v375 = vmul.f32 %v98, %v353
    %v376 = vmul.f32 %v99, %v357
    %v377 = vmul.f32 %v100, %v357
    %v378 = vmul.f32 %v101, %v361
    %v379 = vmul.f32 %v102, %v361
    %v380 = vmul.f32 %v103, %v365
    %v381 = vmul.f32 %v104, %v365
    %v382 = vmax.f32 %v366, %v368
    %v383 = vmax.f32 %v382, %v370
    %v384 = vmax.f32 %v383, %v372
    %v385 = vrot.slane %v384, 4
    %v386 = vmax.f32 %v384, %v385
    %v387 = vrot.slane %v386, 2
    %v388 = vmax.f32 %v386, %v387
    %v389 = vrot.slane %v388, 1
    %v390 = vmax.f32 %v388, %v389
    %v391 = vmax.f32 %v367, %v369
    %v392 = vmax.f32 %v391, %v371
    %v393 = vmax.f32 %v392, %v373
    %v394 = vrot.slane %v393, 4
    %v395 = vmax.f32 %v393, %v394
    %v396 = vrot.slane %v395, 2
    %v397 = vmax.f32 %v395, %v396
    %v398 = vrot.slane %v397, 1
    %v399 = vmax.f32 %v397, %v398
    %v400 = vmax.f32 %v374, %v376
    %v401 = vmax.f32 %v400, %v378
    %v402 = vmax.f32 %v401, %v380
    %v403 = vrot.slane %v402, 4
    %v404 = vmax.f32 %v402, %v403
    %v405 = vrot.slane %v404, 2
    %v406 = vmax.f32 %v404, %v405
    %v407 = vrot.slane %v406, 1
    %v408 = vmax.f32 %v406, %v407
    %v409 = vmax.f32 %v375, %v377
    %v410 = vmax.f32 %v409, %v379
    %v411 = vmax.f32 %v410, %v381
    %v412 = vrot.slane %v411, 4
    %v413 = vmax.f32 %v411, %v412
    %v414 = vrot.slane %v413, 2
    %v415 = vmax.f32 %v413, %v414
    %v416 = vrot.slane %v415, 1
    %v417 = vmax.f32 %v415, %v416
    %v418 = vadd.f32 %v366, %v368
    %v419 = vadd.f32 %v418, %v370
    %v420 = vadd.f32 %v419, %v372
    %v421 = vrot.slane %v420, 4
    %v422 = vadd.f32 %v420, %v421
    %v423 = vrot.slane %v422, 2
    %v424 = vadd.f32 %v422, %v423
    %v425 = vrot.slane %v424, 1
    %v426 = vadd.f32 %v424, %v425
    %v427 = vadd.f32 %v367, %v369
    %v428 = vadd.f32 %v427, %v371
    %v429 = vadd.f32 %v428, %v373
    %v430 = vrot.slane %v429, 4
    %v431 = vadd.f32 %v429, %v430
    %v432 = vrot.slane %v431, 2
    %v433 = vadd.f32 %v431, %v432
    %v434 = vrot.slane %v433, 1
    %v435 = vadd.f32 %v433, %v434
    %v436 = vadd.f32 %v374, %v376
    %v437 = vadd.f32 %v436, %v378
    %v438 = vadd.f32 %v437, %v380
    %v439 = vrot.slane %v438, 4
    %v440 = vadd.f32 %v438, %v439
    %v441 = vrot.slane %v440, 2
    %v442 = vadd.f32 %v440, %v441
    %v443 = vrot.slane %v442, 1
    %v444 = vadd.f32 %v442, %v443
    %v445 = vadd.f32 %v375, %v377
    %v446 = vadd.f32 %v445, %v379
    %v447 = vadd.f32 %v446, %v381
    %v448 = vrot.slane %v447, 4
    %v449 = vadd.f32 %v447, %v448
    %v450 = vrot.slane %v449, 2
    %v451 = vadd.f32 %v449, %v450
    %v452 = vrot.slane %v451, 1
    %v453 = vadd.f32 %v451, %v452
    %v454 = vrcp.pop 32.0
    %v455 = vmul.f32 %v426, %v454
    %v456 = vmul.f32 %v435, %v454
    %v457 = vmul.f32 %v444, %v454
    %v458 = vmul.f32 %v453, %v454
    %v463 = vsel %vm216, %v408, %v390
    %v464 = vsel %vm216, %v417, %v399
    %v471 = vsel %vm265, %v457, %v455
    %v472 = vsel %vm265, %v458, %v456
    %v475 = vsel %vm268, %v463, %v471
    %v476 = vsel %vm268, %v464, %v472
    %v477 = vadd.s32 %v171, 128
    %v478 = vshra.s32 %v171, 4
    %v479 = vshra.s32 %v477, 4
    %v480 = vand.u32 %v171, 15
    %v481 = vand.u32 %v477, 15
    %vm482 = vcmp.lt.s32.totalorder %v480, 15
    %vm483 = vcmp.lt.s32.totalorder %v481, 15
    %v484 = vsel %vm482, 1, 0
    %v485 = vsel %vm483, 1, 0
    %v486 = vcvt.s32.f32 %v484
    %v487 = vcvt.s32.f32 %v485
    %vm488 = vcmp.ge.s32.totalorder %v480, 1
    %vm489 = vcmp.ge.s32.totalorder %v481, 1
    %v490 = vsel %vm488, 1, 0
    %v491 = vsel %vm489, 1, 0
    %v492 = vcvt.s32.f32 %v490
    %v493 = vcvt.s32.f32 %v491
    %vm494 = vcmp.lt.s32.totalorder %v478, 15
    %vm495 = vcmp.lt.s32.totalorder %v479, 15
    %v496 = vsel %vm494, 1, 0
    %v497 = vsel %vm495, 1, 0
    %v498 = vcvt.s32.f32 %v496
    %v499 = vcvt.s32.f32 %v497
    %vm500 = vcmp.ge.s32.totalorder %v478, 1
    %vm501 = vcmp.ge.s32.totalorder %v479, 1
    %v502 = vsel %vm500, 1, 0
    %v503 = vsel %vm501, 1, 0
    %v504 = vcvt.s32.f32 %v502
    %v505 = vcvt.s32.f32 %v503
    %vm506 = vcmp.lt.s32.totalorder %v480, 14
    %vm507 = vcmp.lt.s32.totalorder %v481, 14
    %v508 = vsel %vm506, 1, 0
    %v509 = vsel %vm507, 1, 0
    %v510 = vcvt.s32.f32 %v508
    %v511 = vcvt.s32.f32 %v509
    %vm512 = vcmp.ge.s32.totalorder %v480, 2
    %vm513 = vcmp.ge.s32.totalorder %v481, 2
    %v514 = vsel %vm512, 1, 0
    %v515 = vsel %vm513, 1, 0
    %v516 = vcvt.s32.f32 %v514
    %v517 = vcvt.s32.f32 %v515
    %vm518 = vcmp.lt.s32.totalorder %v478, 14
    %vm519 = vcmp.lt.s32.totalorder %v479, 14
    %v520 = vsel %vm518, 1, 0
    %v521 = vsel %vm519, 1, 0
    %v522 = vcvt.s32.f32 %v520
    %v523 = vcvt.s32.f32 %v521
    %vm524 = vcmp.ge.s32.totalorder %v478, 2
    %vm525 = vcmp.ge.s32.totalorder %v479, 2
    %v526 = vsel %vm524, 1, 0
    %v527 = vsel %vm525, 1, 0
    %v528 = vcvt.s32.f32 %v526
    %v529 = vcvt.s32.f32 %v527
    %vm530 = vcmp.lt.s32.totalorder %v480, 13
    %vm531 = vcmp.lt.s32.totalorder %v481, 13
    %v532 = vsel %vm530, 1, 0
    %v533 = vsel %vm531, 1, 0
    %v534 = vcvt.s32.f32 %v532
    %v535 = vcvt.s32.f32 %v533
    %vm536 = vcmp.ge.s32.totalorder %v480, 3
    %vm537 = vcmp.ge.s32.totalorder %v481, 3
    %v538 = vsel %vm536, 1, 0
    %v539 = vsel %vm537, 1, 0
    %v540 = vcvt.s32.f32 %v538
    %v541 = vcvt.s32.f32 %v539
    %vm542 = vcmp.lt.s32.totalorder %v478, 13
    %vm543 = vcmp.lt.s32.totalorder %v479, 13
    %v544 = vsel %vm542, 1, 0
    %v545 = vsel %vm543, 1, 0
    %v546 = vcvt.s32.f32 %v544
    %v547 = vcvt.s32.f32 %v545
    %vm548 = vcmp.ge.s32.totalorder %v478, 3
    %vm549 = vcmp.ge.s32.totalorder %v479, 3
    %v550 = vsel %vm548, 1, 0
    %v551 = vsel %vm549, 1, 0
    %v552 = vcvt.s32.f32 %v550
    %v553 = vcvt.s32.f32 %v551
    %554 = vrot.lane.b32.xlu0 %v475, 3
    %v555 = vpop.permute.xlu0 %554
    %556 = vrot.lane.b32.xlu0 %v476, 3
    %v557 = vpop.permute.xlu0 %556
    %vm558 = vcmp.lt.s32.totalorder %v171, 3
    %v559 = vsel %vm558, %v555, %v557
    %v560 = vsel %vm558, %v557, %v555
    %v561 = vmul.f32 %v560, %v540
    %v562 = vmul.f32 %v559, %v541
    %563 = vrot.lane.b32.xlu0 %v475, 2
    %v564 = vpop.permute.xlu0 %563
    %565 = vrot.lane.b32.xlu0 %v476, 2
    %v566 = vpop.permute.xlu0 %565
    %vm567 = vcmp.lt.s32.totalorder %v171, 2
    %v568 = vsel %vm567, %v564, %v566
    %v569 = vsel %vm567, %v566, %v564
    %v570 = vmul.f32 %v569, %v516
    %v571 = vmul.f32 %v568, %v517
    %572 = vrot.lane.b32.xlu0 %v475, 1
    %v573 = vpop.permute.xlu0 %572
    %574 = vrot.lane.b32.xlu0 %v476, 1
    %v575 = vpop.permute.xlu0 %574
    %vm576 = vcmp.lt.s32.totalorder %v171, 1
    %v577 = vsel %vm576, %v573, %v575
    %v578 = vsel %vm576, %v575, %v573
    %v579 = vmul.f32 %v578, %v492
    %v580 = vmul.f32 %v577, %v493
    %581 = vrot.lane.b32.xlu0 %v475, 127
    %v582 = vpop.permute.xlu0 %581
    %583 = vrot.lane.b32.xlu0 %v476, 127
    %v584 = vpop.permute.xlu0 %583
    %vm585 = vcmp.lt.s32.totalorder %v171, 127
    %v586 = vsel %vm585, %v582, %v584
    %v587 = vsel %vm585, %v584, %v582
    %v588 = vmul.f32 %v586, %v486
    %v589 = vmul.f32 %v587, %v487
    %590 = vrot.lane.b32.xlu0 %v475, 126
    %v591 = vpop.permute.xlu0 %590
    %592 = vrot.lane.b32.xlu0 %v476, 126
    %v593 = vpop.permute.xlu0 %592
    %vm594 = vcmp.lt.s32.totalorder %v171, 126
    %v595 = vsel %vm594, %v591, %v593
    %v596 = vsel %vm594, %v593, %v591
    %v597 = vmul.f32 %v595, %v510
    %v598 = vmul.f32 %v596, %v511
    %599 = vrot.lane.b32.xlu0 %v475, 125
    %v600 = vpop.permute.xlu0 %599
    %601 = vrot.lane.b32.xlu0 %v476, 125
    %v602 = vpop.permute.xlu0 %601
    %vm603 = vcmp.lt.s32.totalorder %v171, 125
    %v604 = vsel %vm603, %v600, %v602
    %v605 = vsel %vm603, %v602, %v600
    %v606 = vmul.f32 %v604, %v534
    %v607 = vmul.f32 %v605, %v535
    %v608 = vld [vmem:[%s5] sm:$0xf]
    %610 = vset.pattern.permute.xlu0 0
    %611 = vperm.xlu0 %610, %v608
    %v612 = vpop.permute.xlu0 %611
    %v614 = vmul.f32 %v612, %v561
    %v615 = vmul.f32 %v612, %v562
    %616 = vset.pattern.permute.xlu0 1
    %617 = vperm.xlu0 %616, %v608
    %v618 = vpop.permute.xlu0 %617
    %v620 = vmul.f32 %v618, %v570
    %v621 = vmul.f32 %v618, %v571
    %v622 = vadd.f32 %v614, %v620
    %v623 = vadd.f32 %v615, %v621
    %624 = vset.pattern.permute.xlu0 2
    %625 = vperm.xlu0 %624, %v608
    %v626 = vpop.permute.xlu0 %625
    %v628 = vmul.f32 %v626, %v579
    %v629 = vmul.f32 %v626, %v580
    %v630 = vadd.f32 %v622, %v628
    %v631 = vadd.f32 %v623, %v629
    %632 = vset.pattern.permute.xlu0 3
    %633 = vperm.xlu0 %632, %v608
    %v634 = vpop.permute.xlu0 %633
    %v636 = vmul.f32 %v634, %v475
    %v637 = vmul.f32 %v634, %v476
    %v638 = vadd.f32 %v630, %v636
    %v639 = vadd.f32 %v631, %v637
    %640 = vset.pattern.permute.xlu0 4
    %641 = vperm.xlu0 %640, %v608
    %v642 = vpop.permute.xlu0 %641
    %v644 = vmul.f32 %v642, %v588
    %v645 = vmul.f32 %v642, %v589
    %v646 = vadd.f32 %v638, %v644
    %v647 = vadd.f32 %v639, %v645
    %648 = vset.pattern.permute.xlu0 5
    %649 = vperm.xlu0 %648, %v608
    %v650 = vpop.permute.xlu0 %649
    %v652 = vmul.f32 %v650, %v597
    %v653 = vmul.f32 %v650, %v598
    %v654 = vadd.f32 %v646, %v652
    %v655 = vadd.f32 %v647, %v653
    %656 = vset.pattern.permute.xlu0 6
    %657 = vperm.xlu0 %656, %v608
    %v658 = vpop.permute.xlu0 %657
    %v660 = vmul.f32 %v658, %v606
    %v661 = vmul.f32 %v658, %v607
    %v662 = vadd.f32 %v654, %v660
    %v663 = vadd.f32 %v655, %v661
    %664 = vrot.lane.b32.xlu0 %v662, 48
    %v665 = vpop.permute.xlu0 %664
    %666 = vrot.lane.b32.xlu0 %v663, 48
    %v667 = vpop.permute.xlu0 %666
    %vm668 = vcmp.lt.s32.totalorder %v171, 48
    %v669 = vsel %vm668, %v665, %v667
    %v670 = vsel %vm668, %v667, %v665
    %v671 = vmul.f32 %v670, %v552
    %v672 = vmul.f32 %v669, %v553
    %v673 = vadd.f32 %v671, 0.0
    %v674 = vadd.f32 %v672, 0.0
    %675 = vset.pattern.permute.xlu0 7
    %676 = vperm.xlu0 %675, %v608
    %v677 = vpop.permute.xlu0 %676
    %v679 = vmul.f32 %v677, %v561
    %v680 = vmul.f32 %v677, %v562
    %681 = vset.pattern.permute.xlu0 8
    %682 = vperm.xlu0 %681, %v608
    %v683 = vpop.permute.xlu0 %682
    %v685 = vmul.f32 %v683, %v570
    %v686 = vmul.f32 %v683, %v571
    %v687 = vadd.f32 %v679, %v685
    %v688 = vadd.f32 %v680, %v686
    %689 = vset.pattern.permute.xlu0 9
    %690 = vperm.xlu0 %689, %v608
    %v691 = vpop.permute.xlu0 %690
    %v693 = vmul.f32 %v691, %v579
    %v694 = vmul.f32 %v691, %v580
    %v695 = vadd.f32 %v687, %v693
    %v696 = vadd.f32 %v688, %v694
    %697 = vset.pattern.permute.xlu0 10
    %698 = vperm.xlu0 %697, %v608
    %v699 = vpop.permute.xlu0 %698
    %v701 = vmul.f32 %v699, %v475
    %v702 = vmul.f32 %v699, %v476
    %v703 = vadd.f32 %v695, %v701
    %v704 = vadd.f32 %v696, %v702
    %705 = vset.pattern.permute.xlu0 11
    %706 = vperm.xlu0 %705, %v608
    %v707 = vpop.permute.xlu0 %706
    %v709 = vmul.f32 %v707, %v588
    %v710 = vmul.f32 %v707, %v589
    %v711 = vadd.f32 %v703, %v709
    %v712 = vadd.f32 %v704, %v710
    %713 = vset.pattern.permute.xlu0 12
    %714 = vperm.xlu0 %713, %v608
    %v715 = vpop.permute.xlu0 %714
    %v717 = vmul.f32 %v715, %v597
    %v718 = vmul.f32 %v715, %v598
    %v719 = vadd.f32 %v711, %v717
    %v720 = vadd.f32 %v712, %v718
    %721 = vset.pattern.permute.xlu0 13
    %722 = vperm.xlu0 %721, %v608
    %v723 = vpop.permute.xlu0 %722
    %v725 = vmul.f32 %v723, %v606
    %v726 = vmul.f32 %v723, %v607
    %v727 = vadd.f32 %v719, %v725
    %v728 = vadd.f32 %v720, %v726
    %729 = vrot.lane.b32.xlu0 %v727, 32
    %v730 = vpop.permute.xlu0 %729
    %731 = vrot.lane.b32.xlu0 %v728, 32
    %v732 = vpop.permute.xlu0 %731
    %vm733 = vcmp.lt.s32.totalorder %v171, 32
    %v734 = vsel %vm733, %v730, %v732
    %v735 = vsel %vm733, %v732, %v730
    %v736 = vmul.f32 %v735, %v528
    %v737 = vmul.f32 %v734, %v529
    %v738 = vadd.f32 %v673, %v736
    %v739 = vadd.f32 %v674, %v737
    %740 = vset.pattern.permute.xlu0 14
    %741 = vperm.xlu0 %740, %v608
    %v742 = vpop.permute.xlu0 %741
    %v744 = vmul.f32 %v742, %v561
    %v745 = vmul.f32 %v742, %v562
    %746 = vset.pattern.permute.xlu0 15
    %747 = vperm.xlu0 %746, %v608
    %v748 = vpop.permute.xlu0 %747
    %v750 = vmul.f32 %v748, %v570
    %v751 = vmul.f32 %v748, %v571
    %v752 = vadd.f32 %v744, %v750
    %v753 = vadd.f32 %v745, %v751
    %754 = vset.pattern.permute.xlu0 16
    %755 = vperm.xlu0 %754, %v608
    %v756 = vpop.permute.xlu0 %755
    %v758 = vmul.f32 %v756, %v579
    %v759 = vmul.f32 %v756, %v580
    %v760 = vadd.f32 %v752, %v758
    %v761 = vadd.f32 %v753, %v759
    %762 = vset.pattern.permute.xlu0 17
    %763 = vperm.xlu0 %762, %v608
    %v764 = vpop.permute.xlu0 %763
    %v766 = vmul.f32 %v764, %v475
    %v767 = vmul.f32 %v764, %v476
    %v768 = vadd.f32 %v760, %v766
    %v769 = vadd.f32 %v761, %v767
    %770 = vset.pattern.permute.xlu0 18
    %771 = vperm.xlu0 %770, %v608
    %v772 = vpop.permute.xlu0 %771
    %v774 = vmul.f32 %v772, %v588
    %v775 = vmul.f32 %v772, %v589
    %v776 = vadd.f32 %v768, %v774
    %v777 = vadd.f32 %v769, %v775
    %778 = vset.pattern.permute.xlu0 19
    %779 = vperm.xlu0 %778, %v608
    %v780 = vpop.permute.xlu0 %779
    %v782 = vmul.f32 %v780, %v597
    %v783 = vmul.f32 %v780, %v598
    %v784 = vadd.f32 %v776, %v782
    %v785 = vadd.f32 %v777, %v783
    %786 = vset.pattern.permute.xlu0 20
    %787 = vperm.xlu0 %786, %v608
    %v788 = vpop.permute.xlu0 %787
    %v790 = vmul.f32 %v788, %v606
    %v791 = vmul.f32 %v788, %v607
    %v792 = vadd.f32 %v784, %v790
    %v793 = vadd.f32 %v785, %v791
    %794 = vrot.lane.b32.xlu0 %v792, 16
    %v795 = vpop.permute.xlu0 %794
    %796 = vrot.lane.b32.xlu0 %v793, 16
    %v797 = vpop.permute.xlu0 %796
    %vm798 = vcmp.lt.s32.totalorder %v171, 16
    %v799 = vsel %vm798, %v795, %v797
    %v800 = vsel %vm798, %v797, %v795
    %v801 = vmul.f32 %v800, %v504
    %v802 = vmul.f32 %v799, %v505
    %v803 = vadd.f32 %v738, %v801
    %v804 = vadd.f32 %v739, %v802
    %805 = vset.pattern.permute.xlu0 21
    %806 = vperm.xlu0 %805, %v608
    %v807 = vpop.permute.xlu0 %806
    %v809 = vmul.f32 %v807, %v561
    %v810 = vmul.f32 %v807, %v562
    %811 = vset.pattern.permute.xlu0 22
    %812 = vperm.xlu0 %811, %v608
    %v813 = vpop.permute.xlu0 %812
    %v815 = vmul.f32 %v813, %v570
    %v816 = vmul.f32 %v813, %v571
    %v817 = vadd.f32 %v809, %v815
    %v818 = vadd.f32 %v810, %v816
    %819 = vset.pattern.permute.xlu0 23
    %820 = vperm.xlu0 %819, %v608
    %v821 = vpop.permute.xlu0 %820
    %v823 = vmul.f32 %v821, %v579
    %v824 = vmul.f32 %v821, %v580
    %v825 = vadd.f32 %v817, %v823
    %v826 = vadd.f32 %v818, %v824
    %827 = vset.pattern.permute.xlu0 24
    %828 = vperm.xlu0 %827, %v608
    %v829 = vpop.permute.xlu0 %828
    %v831 = vmul.f32 %v829, %v475
    %v832 = vmul.f32 %v829, %v476
    %v833 = vadd.f32 %v825, %v831
    %v834 = vadd.f32 %v826, %v832
    %835 = vset.pattern.permute.xlu0 25
    %836 = vperm.xlu0 %835, %v608
    %v837 = vpop.permute.xlu0 %836
    %v839 = vmul.f32 %v837, %v588
    %v840 = vmul.f32 %v837, %v589
    %v841 = vadd.f32 %v833, %v839
    %v842 = vadd.f32 %v834, %v840
    %843 = vset.pattern.permute.xlu0 26
    %844 = vperm.xlu0 %843, %v608
    %v845 = vpop.permute.xlu0 %844
    %v847 = vmul.f32 %v845, %v597
    %v848 = vmul.f32 %v845, %v598
    %v849 = vadd.f32 %v841, %v847
    %v850 = vadd.f32 %v842, %v848
    %851 = vset.pattern.permute.xlu0 27
    %852 = vperm.xlu0 %851, %v608
    %v853 = vpop.permute.xlu0 %852
    %v855 = vmul.f32 %v853, %v606
    %v856 = vmul.f32 %v853, %v607
    %v857 = vadd.f32 %v849, %v855
    %v858 = vadd.f32 %v850, %v856
    %v859 = vadd.f32 %v803, %v857
    %v860 = vadd.f32 %v804, %v858
    %861 = vset.pattern.permute.xlu0 28
    %862 = vperm.xlu0 %861, %v608
    %v863 = vpop.permute.xlu0 %862
    %v865 = vmul.f32 %v863, %v561
    %v866 = vmul.f32 %v863, %v562
    %867 = vset.pattern.permute.xlu0 29
    %868 = vperm.xlu0 %867, %v608
    %v869 = vpop.permute.xlu0 %868
    %v871 = vmul.f32 %v869, %v570
    %v872 = vmul.f32 %v869, %v571
    %v873 = vadd.f32 %v865, %v871
    %v874 = vadd.f32 %v866, %v872
    %875 = vset.pattern.permute.xlu0 30
    %876 = vperm.xlu0 %875, %v608
    %v877 = vpop.permute.xlu0 %876
    %v879 = vmul.f32 %v877, %v579
    %v880 = vmul.f32 %v877, %v580
    %v881 = vadd.f32 %v873, %v879
    %v882 = vadd.f32 %v874, %v880
    %883 = vset.pattern.permute.xlu0 31
    %884 = vperm.xlu0 %883, %v608
    %v885 = vpop.permute.xlu0 %884
    %v887 = vmul.f32 %v885, %v475
    %v888 = vmul.f32 %v885, %v476
    %v889 = vadd.f32 %v881, %v887
    %v890 = vadd.f32 %v882, %v888
    %891 = vset.pattern.permute.xlu0 32
    %892 = vperm.xlu0 %891, %v608
    %v893 = vpop.permute.xlu0 %892
    %v895 = vmul.f32 %v893, %v588
    %v896 = vmul.f32 %v893, %v589
    %v897 = vadd.f32 %v889, %v895
    %v898 = vadd.f32 %v890, %v896
    %899 = vset.pattern.permute.xlu0 33
    %900 = vperm.xlu0 %899, %v608
    %v901 = vpop.permute.xlu0 %900
    %v903 = vmul.f32 %v901, %v597
    %v904 = vmul.f32 %v901, %v598
    %v905 = vadd.f32 %v897, %v903
    %v906 = vadd.f32 %v898, %v904
    %907 = vset.pattern.permute.xlu0 34
    %908 = vperm.xlu0 %907, %v608
    %v909 = vpop.permute.xlu0 %908
    %v911 = vmul.f32 %v909, %v606
    %v912 = vmul.f32 %v909, %v607
    %v913 = vadd.f32 %v905, %v911
    %v914 = vadd.f32 %v906, %v912
    %915 = vrot.lane.b32.xlu0 %v913, 112
    %v916 = vpop.permute.xlu0 %915
    %917 = vrot.lane.b32.xlu0 %v914, 112
    %v918 = vpop.permute.xlu0 %917
    %vm919 = vcmp.lt.s32.totalorder %v171, 112
    %v920 = vsel %vm919, %v916, %v918
    %v921 = vsel %vm919, %v918, %v916
    %v922 = vmul.f32 %v920, %v498
    %v923 = vmul.f32 %v921, %v499
    %v924 = vadd.f32 %v859, %v922
    %v925 = vadd.f32 %v860, %v923
    %926 = vset.pattern.permute.xlu0 35
    %927 = vperm.xlu0 %926, %v608
    %v928 = vpop.permute.xlu0 %927
    %v930 = vmul.f32 %v928, %v561
    %v931 = vmul.f32 %v928, %v562
    %932 = vset.pattern.permute.xlu0 36
    %933 = vperm.xlu0 %932, %v608
    %v934 = vpop.permute.xlu0 %933
    %v936 = vmul.f32 %v934, %v570
    %v937 = vmul.f32 %v934, %v571
    %v938 = vadd.f32 %v930, %v936
    %v939 = vadd.f32 %v931, %v937
    %940 = vset.pattern.permute.xlu0 37
    %941 = vperm.xlu0 %940, %v608
    %v942 = vpop.permute.xlu0 %941
    %v944 = vmul.f32 %v942, %v579
    %v945 = vmul.f32 %v942, %v580
    %v946 = vadd.f32 %v938, %v944
    %v947 = vadd.f32 %v939, %v945
    %948 = vset.pattern.permute.xlu0 38
    %949 = vperm.xlu0 %948, %v608
    %v950 = vpop.permute.xlu0 %949
    %v952 = vmul.f32 %v950, %v475
    %v953 = vmul.f32 %v950, %v476
    %v954 = vadd.f32 %v946, %v952
    %v955 = vadd.f32 %v947, %v953
    %956 = vset.pattern.permute.xlu0 39
    %957 = vperm.xlu0 %956, %v608
    %v958 = vpop.permute.xlu0 %957
    %v960 = vmul.f32 %v958, %v588
    %v961 = vmul.f32 %v958, %v589
    %v962 = vadd.f32 %v954, %v960
    %v963 = vadd.f32 %v955, %v961
    %964 = vset.pattern.permute.xlu0 40
    %965 = vperm.xlu0 %964, %v608
    %v966 = vpop.permute.xlu0 %965
    %v968 = vmul.f32 %v966, %v597
    %v969 = vmul.f32 %v966, %v598
    %v970 = vadd.f32 %v962, %v968
    %v971 = vadd.f32 %v963, %v969
    %972 = vset.pattern.permute.xlu0 41
    %973 = vperm.xlu0 %972, %v608
    %v974 = vpop.permute.xlu0 %973
    %v976 = vmul.f32 %v974, %v606
    %v977 = vmul.f32 %v974, %v607
    %v978 = vadd.f32 %v970, %v976
    %v979 = vadd.f32 %v971, %v977
    %980 = vrot.lane.b32.xlu0 %v978, 96
    %v981 = vpop.permute.xlu0 %980
    %982 = vrot.lane.b32.xlu0 %v979, 96
    %v983 = vpop.permute.xlu0 %982
    %vm984 = vcmp.lt.s32.totalorder %v171, 96
    %v985 = vsel %vm984, %v981, %v983
    %v986 = vsel %vm984, %v983, %v981
    %v987 = vmul.f32 %v985, %v522
    %v988 = vmul.f32 %v986, %v523
    %v989 = vadd.f32 %v924, %v987
    %v990 = vadd.f32 %v925, %v988
    %991 = vset.pattern.permute.xlu0 42
    %992 = vperm.xlu0 %991, %v608
    %v993 = vpop.permute.xlu0 %992
    %v995 = vmul.f32 %v993, %v561
    %v996 = vmul.f32 %v993, %v562
    %997 = vset.pattern.permute.xlu0 43
    %998 = vperm.xlu0 %997, %v608
    %v999 = vpop.permute.xlu0 %998
    %v1001 = vmul.f32 %v999, %v570
    %v1002 = vmul.f32 %v999, %v571
    %v1003 = vadd.f32 %v995, %v1001
    %v1004 = vadd.f32 %v996, %v1002
    %1005 = vset.pattern.permute.xlu0 44
    %1006 = vperm.xlu0 %1005, %v608
    %v1007 = vpop.permute.xlu0 %1006
    %v1009 = vmul.f32 %v1007, %v579
    %v1010 = vmul.f32 %v1007, %v580
    %v1011 = vadd.f32 %v1003, %v1009
    %v1012 = vadd.f32 %v1004, %v1010
    %1013 = vset.pattern.permute.xlu0 45
    %1014 = vperm.xlu0 %1013, %v608
    %v1015 = vpop.permute.xlu0 %1014
    %v1017 = vmul.f32 %v1015, %v475
    %v1018 = vmul.f32 %v1015, %v476
    %v1019 = vadd.f32 %v1011, %v1017
    %v1020 = vadd.f32 %v1012, %v1018
    %1021 = vset.pattern.permute.xlu0 46
    %1022 = vperm.xlu0 %1021, %v608
    %v1023 = vpop.permute.xlu0 %1022
    %v1025 = vmul.f32 %v1023, %v588
    %v1026 = vmul.f32 %v1023, %v589
    %v1027 = vadd.f32 %v1019, %v1025
    %v1028 = vadd.f32 %v1020, %v1026
    %1029 = vset.pattern.permute.xlu0 47
    %1030 = vperm.xlu0 %1029, %v608
    %v1031 = vpop.permute.xlu0 %1030
    %v1033 = vmul.f32 %v1031, %v597
    %v1034 = vmul.f32 %v1031, %v598
    %v1035 = vadd.f32 %v1027, %v1033
    %v1036 = vadd.f32 %v1028, %v1034
    %1037 = vset.pattern.permute.xlu0 48
    %1038 = vperm.xlu0 %1037, %v608
    %v1039 = vpop.permute.xlu0 %1038
    %v1041 = vmul.f32 %v1039, %v606
    %v1042 = vmul.f32 %v1039, %v607
    %v1043 = vadd.f32 %v1035, %v1041
    %v1044 = vadd.f32 %v1036, %v1042
    %1045 = vrot.lane.b32.xlu0 %v1043, 80
    %v1046 = vpop.permute.xlu0 %1045
    %1047 = vrot.lane.b32.xlu0 %v1044, 80
    %v1048 = vpop.permute.xlu0 %1047
    %vm1049 = vcmp.lt.s32.totalorder %v171, 80
    %v1050 = vsel %vm1049, %v1046, %v1048
    %v1051 = vsel %vm1049, %v1048, %v1046
    %v1052 = vmul.f32 %v1050, %v546
    %v1053 = vmul.f32 %v1051, %v547
    %v1054 = vadd.f32 %v989, %v1052
    %v1055 = vadd.f32 %v990, %v1053
    %v1058 = vrot.slane %v1054, 2
    %v1059 = vrot.slane %v1055, 2
    %v1062 = vadd.f32 %v1054, %v1058
    %v1063 = vadd.f32 %v1055, %v1059
    %s1064 = sld [smem:[#allocation10]]
    %s1065 = sld [smem:[#allocation10 + $0x1]]
    %v1066 = vsel %vm268, %v1062, 0.0
    %v1067 = vsel %vm268, %v1063, 0.0
    %v1068 = vadd.f32 %v1066, %v1067
    %1069 = vadd.xlane.f32.xlu0 %v1068
    %v1070 = vpop.xlane.xlu0 %1069
    %v1071 = vrot.slane %v1070, 4
    %v1072 = vadd.f32 %v1070, %v1071
    %v1073 = vrot.slane %v1072, 2
    %v1074 = vadd.f32 %v1072, %v1073
    %v1075 = vrot.slane %v1074, 1
    %v1076 = vadd.f32 %v1074, %v1075
    %s1077 = vtos %v1076
    %v1078 = vrcp.pop 512.0
    %s1079 = vtos %v1078
    %s1080 = smul.f32 %s1077, %s1079
    %v1081 = vstv %s1080
    %v1082 = vsub.f32 %v1062, %v1081
    %v1083 = vsub.f32 %v1063, %v1081
    %v1084 = vmul.f32 %v1082, %v1082
    %v1085 = vmul.f32 %v1083, %v1083
    %v1086 = vsel %vm268, %v1084, 0.0
    %v1087 = vsel %vm268, %v1085, 0.0
    %v1088 = vadd.f32 %v1086, %v1087
    %1089 = vadd.xlane.f32.xlu0 %v1088
    %v1090 = vpop.xlane.xlu0 %1089
    %v1091 = vrot.slane %v1090, 4
    %v1092 = vadd.f32 %v1090, %v1091
    %v1093 = vrot.slane %v1092, 2
    %v1094 = vadd.f32 %v1092, %v1093
    %v1095 = vrot.slane %v1094, 1
    %v1096 = vadd.f32 %v1094, %v1095
    %s1097 = vtos %v1096
    %v1098 = vrcp.pop 512.0
    %s1099 = vtos %v1098
    %s1100 = smul.f32 %s1097, %s1099
    %s1101 = sadd.f32 %s1100, 1e-05
    %v1102 = vstv %s1101
    %v1103 = vrsqrt.pop %v1102
    %s1104 = vtos %v1103
    %v1105 = vstv %s1104
    %v1106 = vmul.f32 %v1082, %v1105
    %v1107 = vmul.f32 %v1083, %v1105
    %v1108 = vstv %s1064
    %v1109 = vmul.f32 %v1106, %v1108
    %v1110 = vmul.f32 %v1107, %v1108
    %v1111 = vstv %s1065
    %v1112 = vadd.f32 %v1109, %v1111
    %v1113 = vadd.f32 %v1110, %v1111
    %v1114 = vxor.u32 %v1112, 2147483648
    %v1115 = vxor.u32 %v1113, 2147483648
    %v1116 = vmul.f32 %v1114, 1.442695
    %v1117 = vpow.pop %v1116
    %v1118 = vmul.f32 %v1115, 1.442695
    %v1119 = vpow.pop %v1118
    %v1120 = vadd.f32 %v1117, 1.0
    %v1121 = vadd.f32 %v1119, 1.0
    %v1122 = vrcp.pop %v1120
    %v1123 = vmul.f32 1.0, %v1122
    %v1124 = vrcp.pop %v1121
    %v1125 = vmul.f32 1.0, %v1124
    %v1128 = vcombine.low %v1123, %v1125
    %v1130 = vunpack.c.l.s4 1966171168
    %v1131 = vunpack.c.0.s8 %v1130
    %v1132 = vlaneseq
    %v1133 = vshrl.u32 %v1132, 7
    %v1134 = vsub.s32 %v1131, %v1133
    %v1135 = vrot.slane %v1128, %v1134
    %v1136 = vcombine.high %v1135, %v1135
    %v1138 = vunpack.c.l.s4 1966171168
    %v1139 = vunpack.c.0.s8 %v1138
    %v1140 = vlaneseq
    %v1141 = vshrl.u32 %v1140, 7
    %v1142 = vsub.s32 %v1139, %v1141
    %v1143 = vrot.slane %v1135, %v1142
    %v1145 = vunpack.c.l.s4 1966171168
    %v1146 = vunpack.c.0.s8 %v1145
    %v1147 = vlaneseq
    %v1148 = vshrl.u32 %v1147, 7
    %v1149 = vsub.s32 %v1146, %v1148
    %v1150 = vrot.slane %v1136, %v1149
    %v1151 = vlaneseq
    %v1152 = vshrl.u32 %v1151, 7
    %v1153 = vsub.s32 0, %v1152
    %v1154 = vrot.slane %v1143, %v1153
    %v1155 = vlaneseq
    %v1156 = vshrl.u32 %v1155, 7
    %v1157 = vsub.s32 1, %v1156
    %v1158 = vrot.slane %v1143, %v1157
    %v1159 = vlaneseq
    %v1160 = vshrl.u32 %v1159, 7
    %v1161 = vsub.s32 0, %v1160
    %v1162 = vrot.slane %v1150, %v1161
    %v1163 = vlaneseq
    %v1164 = vshrl.u32 %v1163, 7
    %v1165 = vsub.s32 1, %v1164
    %v1166 = vrot.slane %v1150, %v1165
    %v1171 = vmul.f32 %v366, %v1154
    %v1172 = vmul.f32 %v367, %v1158
    %v1173 = vmul.f32 %v368, %v1154
    %v1174 = vmul.f32 %v369, %v1158
    %v1175 = vmul.f32 %v370, %v1154
    %v1176 = vmul.f32 %v371, %v1158
    %v1177 = vmul.f32 %v372, %v1154
    %v1178 = vmul.f32 %v373, %v1158
    %v1179 = vmul.f32 %v374, %v1162
    %v1180 = vmul.f32 %v375, %v1166
    %v1181 = vmul.f32 %v376, %v1162
    %v1182 = vmul.f32 %v377, %v1166
    %v1183 = vmul.f32 %v378, %v1162
    %v1184 = vmul.f32 %v379, %v1166
    %v1185 = vmul.f32 %v380, %v1162
    %v1186 = vmul.f32 %v381, %v1166
    %1187 = vst [vmem:[#allocation12] sm:$0xff] %v1171
    %1188 = vst [vmem:[#allocation12 + $0x8] sm:$0xff] %v1172
    %1189 = vst [vmem:[#allocation12 + $0x10] sm:$0xff] %v1173
    %1190 = vst [vmem:[#allocation12 + $0x18] sm:$0xff] %v1174
    %1191 = vst [vmem:[#allocation12 + $0x20] sm:$0xff] %v1175
    %1192 = vst [vmem:[#allocation12 + $0x28] sm:$0xff] %v1176
    %1193 = vst [vmem:[#allocation12 + $0x30] sm:$0xff] %v1177
    %1194 = vst [vmem:[#allocation12 + $0x38] sm:$0xff] %v1178
    %1195 = vst [vmem:[#allocation12 + $0x40] sm:$0xff] %v1179
    %1196 = vst [vmem:[#allocation12 + $0x48] sm:$0xff] %v1180
    %1197 = vst [vmem:[#allocation12 + $0x50] sm:$0xff] %v1181
    %1198 = vst [vmem:[#allocation12 + $0x58] sm:$0xff] %v1182
    %1199 = vst [vmem:[#allocation12 + $0x60] sm:$0xff] %v1183
    %1200 = vst [vmem:[#allocation12 + $0x68] sm:$0xff] %v1184
    %1201 = vst [vmem:[#allocation12 + $0x70] sm:$0xff] %v1185
    %1202 = vst [vmem:[#allocation12 + $0x78] sm:$0xff] %v1186
    // Predicated region
    $region50: #{tpu_custom_call.1} parent=1 // pred_check
      _
    $region51: #{tpu_custom_call.1} parent=1 // pred_check_branch
      %1204 = sbr.rel (0) target = $region53
    $region52: #{tpu_custom_call.1} parent=1 // pred_region
      %s1206 = ssub.s32 2048, 2048
      %1207 = vsyncadd [#allocation4], %s1206
      %s1208 = sshll.u32 [#allocation12], 4
      %s1209 = int_to_ptr.vmem [resolvable:$true] %s1208
      %1214 = dma.vmem_to_hbm [thread:$0]  %s1209, 2048, %s7, [#allocation4], 256, 256, 16
    $region53: #{tpu_custom_call.1} parent=1 // pred_fallthru
      _
    // Predicated region
    $region54: #{tpu_custom_call.1} parent=1 // pred_check
      _
    $region55: #{tpu_custom_call.1} parent=1 // pred_check_branch
      %1216 = sbr.rel (0) target = $region57
    $region56: #{tpu_custom_call.1} parent=1 // pred_region
      %1217 = dma.done [#allocation4], 2048
    $region57: #{tpu_custom_call.1} parent=1 // pred_fallthru
      _
    %1218 = vsyncpa [#allocation3], 1
    %1219 = vsyncpa [#allocation7], 1
    %1220 = vsyncpa [#allocation4], 1
    %1221 = vsyncpa [#allocation5], 1
    %1222 = vsyncpa [#allocation11], 1

</llo_original>
